<compile_context>
chip_gen: v7x
topology: tpu7x:2x2x1
jax: 0.10.0
libtpu: 0.0.40
codegen_flags: <defaults>
</compile_context>

<pallas_src>
import functools

import jax
import jax.numpy as jnp
import numpy as np
from jax import lax
from jax.experimental import pallas as pl
from jax.experimental.pallas import tpu as pltpu

# ---------------- static configuration ----------------
N_GRAPHEME = 168
N_VOWEL = 11
N_CONSONANT = 7
N_TOTAL = N_GRAPHEME + N_VOWEL + N_CONSONANT      # 186

C, H, W = 4, 16, 16
FEAT = C * H * W                                   # 1024
HIDDEN = 128
CP = 256                                           # class axis padded to 2 x 128 lanes
TILE_ROWS = 8                                      # batch-row tile (sublane multiple)


def _bengali_kernel(lab_ref, x_ref, w1_ref, b1_ref, w2_ref, b2_ref,
                    logits_ref, loss_ref, acc_ref, *, num_valid_rows):
    """One batch-row tile of predictor MLP + 3-head cross-entropy.

    lab_ref    : (TILE_ROWS, 3) int32   labels pre-offset into [0,186), -1 on pad rows
    x_ref      : (TILE_ROWS, FEAT) bf16 flattened image tile
    w1_ref     : (FEAT, HIDDEN) bf16    resident across the grid
    b1_ref     : (1, HIDDEN) f32        resident
    w2_ref     : (HIDDEN, CP) bf16      resident (cols >= N_TOTAL are zero)
    b2_ref     : (1, CP) f32            resident
    logits_ref : (TILE_ROWS, CP) f32    output logits tile (lane-padded)
    loss_ref   : (4,) f32 SMEM          [grapheme, vowel, consonant, total]
    acc_ref    : (3,) f32 SMEM scratch  per-head loss accumulator (persists over grid)
    """
    i = pl.program_id(0)
    tile = x_ref.shape[0]

    # ---- predictor: linear (bf16 x bf16 -> f32 acc) -> ReLU -> linear ----
    h = jnp.dot(x_ref[...], w1_ref[...],
                preferred_element_type=jnp.float32) + b1_ref[...]
    h = jnp.maximum(h, 0.0)
    logits = jnp.dot(h.astype(jnp.bfloat16), w2_ref[...],
                     preferred_element_type=jnp.float32) + b2_ref[...]
    logits_ref[...] = logits

    # ---- 3-head cross-entropy with a single fused exp pass ----
    col = lax.broadcasted_iota(jnp.int32, (tile, CP), 1)
    mask_g = col < N_GRAPHEME
    mask_v = (col >= N_GRAPHEME) & (col < N_GRAPHEME + N_VOWEL)
    mask_c = (col >= N_GRAPHEME + N_VOWEL) & (col < N_TOTAL)

    neg_big = jnp.float32(-1e30)
    mx_g = jnp.max(jnp.where(mask_g, logits, neg_big), axis=1, keepdims=True)
    mx_v = jnp.max(jnp.where(mask_v, logits, neg_big), axis=1, keepdims=True)
    mx_c = jnp.max(jnp.where(mask_c, logits, neg_big), axis=1, keepdims=True)

    # Per-lane segment max -> one exp covers all three heads.  Pad lanes
    # (col >= N_TOTAL) are intentionally NOT guarded: their exp may be large
    # (or +inf) but it is excluded by *selects* below (never multiplied), so
    # it cannot turn into a NaN.
    seg_max = jnp.where(mask_g, mx_g, jnp.where(mask_v, mx_v, mx_c))
    ex = jnp.exp(logits - seg_max)

    s_g = jnp.sum(jnp.where(mask_g, ex, 0.0), axis=1, keepdims=True)
    s_v = jnp.sum(jnp.where(mask_v, ex, 0.0), axis=1, keepdims=True)
    s_c = jnp.sum(jnp.where(mask_c, ex, 0.0), axis=1, keepdims=True)

    lse_vec_g = mx_g + jnp.log(s_g)                 # (tile, 1)
    lse_vec_v = mx_v + jnp.log(s_v)
    lse_vec_c = mx_c + jnp.log(s_c)

    # Row-validity mask only materialized when the batch was padded to a
    # multiple of TILE_ROWS (statically known).
    if num_valid_rows % tile != 0:
        row = lax.broadcasted_iota(jnp.int32, (tile, 1), 0) + i * tile
        valid = (row < num_valid_rows).astype(jnp.float32)
        lse_vec_g = lse_vec_g * valid
        lse_vec_v = lse_vec_v * valid
        lse_vec_c = lse_vec_c * valid

    lse_g = jnp.sum(lse_vec_g)
    lse_v = jnp.sum(lse_vec_v)
    lse_c = jnp.sum(lse_vec_c)

    # Picked logits: one vectorized pick-mask per head (labels are pre-offset
    # into the concatenated class axis; -1 on padded rows matches no column).
    lab = lab_ref[...]                              # (tile, 3) int32
    picked_g = jnp.sum(jnp.where(col == lab[:, 0:1], logits, 0.0))
    picked_v = jnp.sum(jnp.where(col == lab[:, 1:2], logits, 0.0))
    picked_c = jnp.sum(jnp.where(col == lab[:, 2:3], logits, 0.0))

    inv_b = jnp.float32(1.0 / num_valid_rows)

    @pl.when(i == 0)
    def _():
        acc_ref[0] = jnp.float32(0.0)
        acc_ref[1] = jnp.float32(0.0)
        acc_ref[2] = jnp.float32(0.0)

    acc_ref[0] += (lse_g - picked_g) * inv_b
    acc_ref[1] += (lse_v - picked_v) * inv_b
    acc_ref[2] += (lse_c - picked_c) * inv_b

    @pl.when(i == pl.num_programs(0) - 1)
    def _():
        lg = acc_ref[0]
        lv = acc_ref[1]
        lc = acc_ref[2]
        loss_ref[0] = lg
        loss_ref[1] = lv
        loss_ref[2] = lc
        loss_ref[3] = lg + lv + lc


@functools.partial(jax.jit, static_argnames=("b_real",))
def _run_kernel(labels_pad, x_flat_pad, w1, b1, w2, b2, *, b_real):
    b_pad = x_flat_pad.shape[0]
    num_tiles = b_pad // TILE_ROWS
    kernel = functools.partial(_bengali_kernel, num_valid_rows=b_real)

    flops = 2 * b_pad * (FEAT * HIDDEN + HIDDEN * CP)
    bytes_accessed = (x_flat_pad.size * 2 + w1.size * 2 + w2.size * 2
                      + b1.size * 4 + b2.size * 4 + labels_pad.size * 4
                      + b_pad * CP * 4 + 4 * 4)

    return pl.pallas_call(
        kernel,
        grid=(num_tiles,),
        in_specs=[
            pl.BlockSpec((TILE_ROWS, 3), lambda i: (i, 0)),      # labels (per tile)
            pl.BlockSpec((TILE_ROWS, FEAT), lambda i: (i, 0)),   # x (per tile)
            pl.BlockSpec((FEAT, HIDDEN), lambda i: (0, 0)),      # w1: resident
            pl.BlockSpec((1, HIDDEN), lambda i: (0, 0)),         # b1: resident
            pl.BlockSpec((HIDDEN, CP), lambda i: (0, 0)),        # w2: resident
            pl.BlockSpec((1, CP), lambda i: (0, 0)),             # b2: resident
        ],
        out_specs=(
            pl.BlockSpec((TILE_ROWS, CP), lambda i: (i, 0)),     # logits tile
            pl.BlockSpec(memory_space=pltpu.MemorySpace.SMEM),   # loss scalars
        ),
        out_shape=(jax.ShapeDtypeStruct((b_pad, CP), jnp.float32),
                   jax.ShapeDtypeStruct((4,), jnp.float32)),
        scratch_shapes=[pltpu.SMEM((3,), jnp.float32)],
        compiler_params=pltpu.CompilerParams(
            dimension_semantics=("arbitrary",)),
        cost_estimate=pl.CostEstimate(flops=flops,
                                      transcendentals=b_pad * CP + 3 * b_pad,
                                      bytes_accessed=bytes_accessed),
    )(labels_pad, x_flat_pad, w1, b1, w2, b2)


class BengaliClassifierPallas:
    """JAX/Pallas port of BengaliClassifier.forward (cutmix_ratio=0 path)."""

    def __init__(self, key):
        k1, k2, k3, k4 = jax.random.split(key, 4)
        w1 = (jax.random.normal(k1, (FEAT, HIDDEN), jnp.float32)
              * (1.0 / np.sqrt(FEAT)))
        self.b1 = jax.random.normal(k2, (1, HIDDEN), jnp.float32) * 0.01
        w2 = (jax.random.normal(k3, (HIDDEN, N_TOTAL), jnp.float32)
              * (1.0 / np.sqrt(HIDDEN)))
        b2 = jax.random.normal(k4, (1, N_TOTAL), jnp.float32) * 0.01
        # weights live in bf16 (halves weight DMA); class axis padded to 256
        self.w1 = w1.astype(jnp.bfloat16)
        self.w2_pad = jnp.pad(w2, ((0, 0), (0, CP - N_TOTAL))).astype(jnp.bfloat16)
        self.b2_pad = jnp.pad(b2, ((0, 0), (0, CP - N_TOTAL)))
        self._offsets = jnp.array([0, N_GRAPHEME, N_GRAPHEME + N_VOWEL],
                                  jnp.int32)

    def forward(self, x_nchw, y):
        b_real = int(x_nchw.shape[0])
        b_pad = ((b_real + TILE_ROWS - 1) // TILE_ROWS) * TILE_ROWS
        # glue: row-major NCHW flatten + bf16 cast (fuses into the producer)
        x_flat = x_nchw.reshape(b_real, -1).astype(jnp.bfloat16)
        labels = y.astype(jnp.int32) + self._offsets[None, :]    # (B,3) in [0,186)
        if b_pad != b_real:
            x_flat = jnp.pad(x_flat, ((0, b_pad - b_real), (0, 0)))
            labels = jnp.pad(labels, ((0, b_pad - b_real), (0, 0)),
                             constant_values=-1)

        logits_pad, loss_vec = _run_kernel(labels, x_flat, self.w1, self.b1,
                                           self.w2_pad, self.b2_pad,
                                           b_real=b_real)
        logits = logits_pad[:b_real, :N_TOTAL]          # cat(grapheme, vowel, consonant)
        # metrics stay device scalars: no per-step host sync (torch .item()).
        metrics = {
            "loss": loss_vec[3],
            "loss_grapheme": loss_vec[0],
            "loss_vowel": loss_vec[1],
            "loss_consonant": loss_vec[2],
        }
        return loss_vec[3], metrics, logits


def _reference(model, x_nchw, y):
    """Pure-JAX reference at the same bf16/f32 mixed precision."""
    b = x_nchw.shape[0]
    x = x_nchw.reshape(b, -1).astype(jnp.bfloat16)
    h = jnp.dot(x, model.w1, preferred_element_type=jnp.float32) + model.b1
    h = jnp.maximum(h, 0.0)
    logits = (jnp.dot(h.astype(jnp.bfloat16), model.w2_pad,
                      preferred_element_type=jnp.float32) + model.b2_pad)
    logits = logits[:, :N_TOTAL]
    splits = [N_GRAPHEME, N_GRAPHEME + N_VOWEL]
    pg, pv, pc = jnp.split(logits, splits, axis=1)

    def ce(p, lbl):
        logp = jax.nn.log_softmax(p, axis=1)
        return -jnp.mean(jnp.take_along_axis(logp, lbl[:, None], axis=1))

    lg, lv, lc = ce(pg, y[:, 0]), ce(pv, y[:, 1]), ce(pc, y[:, 2])
    return lg + lv + lc, (lg, lv, lc), logits


if __name__ == "__main__":
    B = 16   # small batch; tiled into TILE_ROWS-row grid steps inside the kernel
    key = jax.random.PRNGKey(0)
    kx, ky, kp = jax.random.split(key, 3)

    x = jax.random.normal(kx, (B, C, H, W), jnp.float32)          # NCHW like torch
    y = jnp.stack([
        jax.random.randint(ky, (B,), 0, N_GRAPHEME),
        jax.random.randint(jax.random.fold_in(ky, 1), (B,), 0, N_VOWEL),
        jax.random.randint(jax.random.fold_in(ky, 2), (B,), 0, N_CONSONANT),
    ], axis=1).astype(jnp.int32)                                   # (B, 3)

    model = BengaliClassifierPallas(kp)
    loss, metrics, preds = model.forward(x, y)
    jax.block_until_ready((loss, preds))

    # sanity: compare against a pure-JAX reference at matching precision
    ref_loss, (rg, rv, rc), ref_logits = _reference(model, x, y)
    np.testing.assert_allclose(np.asarray(preds), np.asarray(ref_logits),
                               rtol=2e-2, atol=2e-2)
    np.testing.assert_allclose(float(loss), float(ref_loss), rtol=2e-2, atol=2e-2)
    np.testing.assert_allclose(float(metrics["loss_grapheme"]), float(rg),
                               rtol=2e-2, atol=2e-2)
    np.testing.assert_allclose(float(metrics["loss_vowel"]), float(rv),
                               rtol=2e-2, atol=2e-2)
    np.testing.assert_allclose(float(metrics["loss_consonant"]), float(rc),
                               rtol=2e-2, atol=2e-2)

    print("KERNEL_OK")
</pallas_src>

<mosaic_0001>
module attributes {stable_mosaic.version = 11 : i64} {
  func.func @_bengali_kernel(%arg0: i32, %arg1: memref<8x3xi32, #tpu.memory_space<vmem>>, %arg2: memref<8x1024xbf16, #tpu.memory_space<vmem>>, %arg3: memref<1024x128xbf16, #tpu.memory_space<vmem>>, %arg4: memref<1x128xf32, #tpu.memory_space<vmem>>, %arg5: memref<128x256xbf16, #tpu.memory_space<vmem>>, %arg6: memref<1x256xf32, #tpu.memory_space<vmem>>, %arg7: memref<8x256xf32, #tpu.memory_space<vmem>>, %arg8: memref<4xf32, #tpu.memory_space<smem>>, %arg9: memref<3xf32, #tpu.memory_space<smem>>) attributes {dimension_semantics = [#tpu.dimension_semantics<arbitrary>], iteration_bounds = array<i64: 2>, scalar_prefetch = 0 : i64, scratch_operands = 1 : i64, tpu.core_type = #tpu.core_type<tc>, window_params = [{transform_indices = @transform_0, window_bounds = array<i64: 8, 3>}, {transform_indices = @transform_1, window_bounds = array<i64: 8, 1024>}, {pipeline_mode = #tpu.pipeline_mode<synchronous>, transform_indices = @transform_2, window_bounds = array<i64: 1024, 128>}, {pipeline_mode = #tpu.pipeline_mode<synchronous>, transform_indices = @transform_3, window_bounds = array<i64: 1, 128>}, {pipeline_mode = #tpu.pipeline_mode<synchronous>, transform_indices = @transform_4, window_bounds = array<i64: 128, 256>}, {pipeline_mode = #tpu.pipeline_mode<synchronous>, transform_indices = @transform_5, window_bounds = array<i64: 1, 256>}, {transform_indices = @transform_6, window_bounds = array<i64: 8, 256>}, {transform_indices = @transform_7, window_bounds = array<i64: 4>}]} {
    %c0 = arith.constant 0 : index
    %c0_0 = arith.constant 0 : index
    %0 = vector.load %arg2[%c0, %c0_0] : memref<8x1024xbf16, #tpu.memory_space<vmem>>, vector<8x1024xbf16>
    %c0_1 = arith.constant 0 : index
    %c0_2 = arith.constant 0 : index
    %1 = vector.load %arg3[%c0_1, %c0_2] : memref<1024x128xbf16, #tpu.memory_space<vmem>>, vector<1024x128xbf16>
    %cst = arith.constant dense<0.000000e+00> : vector<8x128xf32>
    %2 = tpu.matmul %0, %1, %cst {dimension_numbers = #tpu.dot_dimension_numbers<[1], [0], [0], [1], [0, 0, 1, 1], [], []>} : vector<8x1024xbf16>, vector<1024x128xbf16>, vector<8x128xf32> -> vector<8x128xf32>
    %c0_3 = arith.constant 0 : index
    %c0_4 = arith.constant 0 : index
    %3 = vector.load %arg4[%c0_3, %c0_4] : memref<1x128xf32, #tpu.memory_space<vmem>>, vector<1x128xf32>
    %4 = vector.broadcast %3 : vector<1x128xf32> to vector<8x128xf32>
    %5 = arith.addf %2, %4 : vector<8x128xf32>
    %cst_5 = arith.constant 0.000000e+00 : f32
    %6 = vector.broadcast %cst_5 : f32 to vector<8x128xf32>
    %7 = arith.maximumf %5, %6 : vector<8x128xf32>
    %8 = arith.truncf %7 : vector<8x128xf32> to vector<8x128xbf16>
    %c0_6 = arith.constant 0 : index
    %c0_7 = arith.constant 0 : index
    %9 = vector.load %arg5[%c0_6, %c0_7] : memref<128x256xbf16, #tpu.memory_space<vmem>>, vector<128x256xbf16>
    %cst_8 = arith.constant dense<0.000000e+00> : vector<8x256xf32>
    %10 = tpu.matmul %8, %9, %cst_8 {dimension_numbers = #tpu.dot_dimension_numbers<[1], [0], [0], [1], [0, 0, 1, 1], [], []>} : vector<8x128xbf16>, vector<128x256xbf16>, vector<8x256xf32> -> vector<8x256xf32>
    %c0_9 = arith.constant 0 : index
    %c0_10 = arith.constant 0 : index
    %11 = vector.load %arg6[%c0_9, %c0_10] : memref<1x256xf32, #tpu.memory_space<vmem>>, vector<1x256xf32>
    %12 = vector.broadcast %11 : vector<1x256xf32> to vector<8x256xf32>
    %13 = arith.addf %10, %12 : vector<8x256xf32>
    %c0_11 = arith.constant 0 : index
    %c0_12 = arith.constant 0 : index
    %14 = vector.load %arg7[%c0_11, %c0_12] : memref<8x256xf32, #tpu.memory_space<vmem>>, vector<8x256xf32>
    tpu.vector_store %arg7[%c0_11, %c0_12], %13 {strides = array<i32>} : memref<8x256xf32, #tpu.memory_space<vmem>>, vector<8x256xf32>,
    %15 = tpu.iota {dimensions = array<i32: 1>} : vector<8x256xi32>
    %c168_i32 = arith.constant 168 : i32
    %16 = vector.broadcast %c168_i32 : i32 to vector<8x256xi32>
    %17 = arith.cmpi slt, %15, %16 : vector<8x256xi32>
    %c168_i32_13 = arith.constant 168 : i32
    %18 = vector.broadcast %c168_i32_13 : i32 to vector<8x256xi32>
    %19 = arith.cmpi sge, %15, %18 : vector<8x256xi32>
    %c179_i32 = arith.constant 179 : i32
    %20 = vector.broadcast %c179_i32 : i32 to vector<8x256xi32>
    %21 = arith.cmpi slt, %15, %20 : vector<8x256xi32>
    %22 = arith.andi %19, %21 : vector<8x256xi1>
    %c179_i32_14 = arith.constant 179 : i32
    %23 = vector.broadcast %c179_i32_14 : i32 to vector<8x256xi32>
    %24 = arith.cmpi sge, %15, %23 : vector<8x256xi32>
    %c186_i32 = arith.constant 186 : i32
    %25 = vector.broadcast %c186_i32 : i32 to vector<8x256xi32>
    %26 = arith.cmpi slt, %15, %25 : vector<8x256xi32>
    %27 = arith.andi %24, %26 : vector<8x256xi1>
    %cst_15 = arith.constant -1.000000e+30 : f32
    %28 = vector.broadcast %cst_15 : f32 to vector<8x256xf32>
    %29 = arith.select %17, %13, %28 : vector<8x256xi1>, vector<8x256xf32>
    %cst_16 = arith.constant dense<0xFF800000> : vector<8xf32>
    %30 = vector.multi_reduction <maximumf>, %29, %cst_16 [1] : vector<8x256xf32> to vector<8xf32>
    %31 = vector.shape_cast %30 : vector<8xf32> to vector<8x1xf32>
    %cst_17 = arith.constant -1.000000e+30 : f32
    %32 = vector.broadcast %cst_17 : f32 to vector<8x256xf32>
    %33 = arith.select %22, %13, %32 : vector<8x256xi1>, vector<8x256xf32>
    %cst_18 = arith.constant dense<0xFF800000> : vector<8xf32>
    %34 = vector.multi_reduction <maximumf>, %33, %cst_18 [1] : vector<8x256xf32> to vector<8xf32>
    %35 = vector.shape_cast %34 : vector<8xf32> to vector<8x1xf32>
    %cst_19 = arith.constant -1.000000e+30 : f32
    %36 = vector.broadcast %cst_19 : f32 to vector<8x256xf32>
    %37 = arith.select %27, %13, %36 : vector<8x256xi1>, vector<8x256xf32>
    %cst_20 = arith.constant dense<0xFF800000> : vector<8xf32>
    %38 = vector.multi_reduction <maximumf>, %37, %cst_20 [1] : vector<8x256xf32> to vector<8xf32>
    %39 = vector.shape_cast %38 : vector<8xf32> to vector<8x1xf32>
    %40 = vector.shape_cast %35 : vector<8x1xf32> to vector<8x1xf32>
    %41 = vector.broadcast %40 : vector<8x1xf32> to vector<8x256xf32>
    %42 = vector.shape_cast %39 : vector<8x1xf32> to vector<8x1xf32>
    %43 = vector.broadcast %42 : vector<8x1xf32> to vector<8x256xf32>
    %44 = arith.select %22, %41, %43 : vector<8x256xi1>, vector<8x256xf32>
    %45 = vector.shape_cast %31 : vector<8x1xf32> to vector<8x1xf32>
    %46 = vector.broadcast %45 : vector<8x1xf32> to vector<8x256xf32>
    %47 = arith.select %17, %46, %44 : vector<8x256xi1>, vector<8x256xf32>
    %48 = arith.subf %13, %47 : vector<8x256xf32>
    %49 = math.exp %48 : vector<8x256xf32>
    %cst_21 = arith.constant 0.000000e+00 : f32
    %50 = vector.broadcast %cst_21 : f32 to vector<8x256xf32>
    %51 = arith.select %17, %49, %50 : vector<8x256xi1>, vector<8x256xf32>
    %cst_22 = arith.constant dense<0.000000e+00> : vector<8xf32>
    %52 = vector.multi_reduction <add>, %51, %cst_22 [1] : vector<8x256xf32> to vector<8xf32>
    %53 = vector.shape_cast %52 : vector<8xf32> to vector<8x1xf32>
    %cst_23 = arith.constant 0.000000e+00 : f32
    %54 = vector.broadcast %cst_23 : f32 to vector<8x256xf32>
    %55 = arith.select %22, %49, %54 : vector<8x256xi1>, vector<8x256xf32>
    %cst_24 = arith.constant dense<0.000000e+00> : vector<8xf32>
    %56 = vector.multi_reduction <add>, %55, %cst_24 [1] : vector<8x256xf32> to vector<8xf32>
    %57 = vector.shape_cast %56 : vector<8xf32> to vector<8x1xf32>
    %cst_25 = arith.constant 0.000000e+00 : f32
    %58 = vector.broadcast %cst_25 : f32 to vector<8x256xf32>
    %59 = arith.select %27, %49, %58 : vector<8x256xi1>, vector<8x256xf32>
    %cst_26 = arith.constant dense<0.000000e+00> : vector<8xf32>
    %60 = vector.multi_reduction <add>, %59, %cst_26 [1] : vector<8x256xf32> to vector<8xf32>
    %61 = vector.shape_cast %60 : vector<8xf32> to vector<8x1xf32>
    %62 = math.log %53 : vector<8x1xf32>
    %63 = arith.addf %31, %62 : vector<8x1xf32>
    %64 = math.log %57 : vector<8x1xf32>
    %65 = arith.addf %35, %64 : vector<8x1xf32>
    %66 = math.log %61 : vector<8x1xf32>
    %67 = arith.addf %39, %66 : vector<8x1xf32>
    %68 = vector.shape_cast %63 : vector<8x1xf32> to vector<1x8x1xf32>
    %cst_27 = arith.constant dense<0.000000e+00> : vector<1xf32>
    %69 = vector.multi_reduction <add>, %68, %cst_27 [1, 2] : vector<1x8x1xf32> to vector<1xf32>
    %70 = vector.shape_cast %69 : vector<1xf32> to vector<1x1x1xf32>
    %71 = vector.extract %70[0, 0, 0] : f32 from vector<1x1x1xf32>
    %72 = vector.shape_cast %65 : vector<8x1xf32> to vector<1x8x1xf32>
    %cst_28 = arith.constant dense<0.000000e+00> : vector<1xf32>
    %73 = vector.multi_reduction <add>, %72, %cst_28 [1, 2] : vector<1x8x1xf32> to vector<1xf32>
    %74 = vector.shape_cast %73 : vector<1xf32> to vector<1x1x1xf32>
    %75 = vector.extract %74[0, 0, 0] : f32 from vector<1x1x1xf32>
    %76 = vector.shape_cast %67 : vector<8x1xf32> to vector<1x8x1xf32>
    %cst_29 = arith.constant dense<0.000000e+00> : vector<1xf32>
    %77 = vector.multi_reduction <add>, %76, %cst_29 [1, 2] : vector<1x8x1xf32> to vector<1xf32>
    %78 = vector.shape_cast %77 : vector<1xf32> to vector<1x1x1xf32>
    %79 = vector.extract %78[0, 0, 0] : f32 from vector<1x1x1xf32>
    %c0_30 = arith.constant 0 : index
    %c0_31 = arith.constant 0 : index
    %80 = vector.load %arg1[%c0_30, %c0_31] : memref<8x3xi32, #tpu.memory_space<vmem>>, vector<8x3xi32>
    %81 = vector.extract_strided_slice %80 {offsets = [0, 0], sizes = [8, 1], strides = [1, 1]} : vector<8x3xi32> to vector<8x1xi32>
    %82 = vector.broadcast %81 : vector<8x1xi32> to vector<8x256xi32>
    %83 = arith.cmpi eq, %15, %82 : vector<8x256xi32>
    %cst_32 = arith.constant 0.000000e+00 : f32
    %84 = vector.broadcast %cst_32 : f32 to vector<8x256xf32>
    %85 = arith.select %83, %13, %84 : vector<8x256xi1>, vector<8x256xf32>
    %86 = vector.shape_cast %85 : vector<8x256xf32> to vector<1x8x256xf32>
    %cst_33 = arith.constant dense<0.000000e+00> : vector<1xf32>
    %87 = vector.multi_reduction <add>, %86, %cst_33 [1, 2] : vector<1x8x256xf32> to vector<1xf32>
    %88 = vector.shape_cast %87 : vector<1xf32> to vector<1x1x1xf32>
    %89 = vector.extract %88[0, 0, 0] : f32 from vector<1x1x1xf32>
    %90 = vector.extract_strided_slice %80 {offsets = [0, 1], sizes = [8, 1], strides = [1, 1]} : vector<8x3xi32> to vector<8x1xi32>
    %91 = vector.broadcast %90 : vector<8x1xi32> to vector<8x256xi32>
    %92 = arith.cmpi eq, %15, %91 : vector<8x256xi32>
    %cst_34 = arith.constant 0.000000e+00 : f32
    %93 = vector.broadcast %cst_34 : f32 to vector<8x256xf32>
    %94 = arith.select %92, %13, %93 : vector<8x256xi1>, vector<8x256xf32>
    %95 = vector.shape_cast %94 : vector<8x256xf32> to vector<1x8x256xf32>
    %cst_35 = arith.constant dense<0.000000e+00> : vector<1xf32>
    %96 = vector.multi_reduction <add>, %95, %cst_35 [1, 2] : vector<1x8x256xf32> to vector<1xf32>
    %97 = vector.shape_cast %96 : vector<1xf32> to vector<1x1x1xf32>
    %98 = vector.extract %97[0, 0, 0] : f32 from vector<1x1x1xf32>
    %99 = vector.extract_strided_slice %80 {offsets = [0, 2], sizes = [8, 1], strides = [1, 1]} : vector<8x3xi32> to vector<8x1xi32>
    %100 = vector.broadcast %99 : vector<8x1xi32> to vector<8x256xi32>
    %101 = arith.cmpi eq, %15, %100 : vector<8x256xi32>
    %cst_36 = arith.constant 0.000000e+00 : f32
    %102 = vector.broadcast %cst_36 : f32 to vector<8x256xf32>
    %103 = arith.select %101, %13, %102 : vector<8x256xi1>, vector<8x256xf32>
    %104 = vector.shape_cast %103 : vector<8x256xf32> to vector<1x8x256xf32>
    %cst_37 = arith.constant dense<0.000000e+00> : vector<1xf32>
    %105 = vector.multi_reduction <add>, %104, %cst_37 [1, 2] : vector<1x8x256xf32> to vector<1xf32>
    %106 = vector.shape_cast %105 : vector<1xf32> to vector<1x1x1xf32>
    %107 = vector.extract %106[0, 0, 0] : f32 from vector<1x1x1xf32>
    %c0_i32 = arith.constant 0 : i32
    %108 = arith.cmpi eq, %arg0, %c0_i32 : i32
    %109 = arith.extui %108 : i1 to i32
    %c0_i32_38 = arith.constant 0 : i32
    %110 = arith.cmpi ne, %109, %c0_i32_38 : i32
    scf.if %110 {
      %cst_47 = arith.constant 0.000000e+00 : f32
      %c0_48 = arith.constant 0 : index
      %129 = memref.load %arg9[%c0_48] : memref<3xf32, #tpu.memory_space<smem>>
      memref.store %cst_47, %arg9[%c0_48] : memref<3xf32, #tpu.memory_space<smem>>
      %cst_49 = arith.constant 0.000000e+00 : f32
      %c1_50 = arith.constant 1 : index
      %130 = memref.load %arg9[%c1_50] : memref<3xf32, #tpu.memory_space<smem>>
      memref.store %cst_49, %arg9[%c1_50] : memref<3xf32, #tpu.memory_space<smem>>
      %cst_51 = arith.constant 0.000000e+00 : f32
      %c2_52 = arith.constant 2 : index
      %131 = memref.load %arg9[%c2_52] : memref<3xf32, #tpu.memory_space<smem>>
      memref.store %cst_51, %arg9[%c2_52] : memref<3xf32, #tpu.memory_space<smem>>
    } else {
    }
    %c0_39 = arith.constant 0 : index
    %111 = memref.load %arg9[%c0_39] : memref<3xf32, #tpu.memory_space<smem>>
    %112 = arith.subf %71, %89 : f32
    %cst_40 = arith.constant 6.250000e-02 : f32
    %113 = arith.mulf %112, %cst_40 : f32
    %114 = arith.addf %111, %113 : f32
    %c0_41 = arith.constant 0 : index
    %115 = memref.load %arg9[%c0_41] : memref<3xf32, #tpu.memory_space<smem>>
    memref.store %114, %arg9[%c0_41] : memref<3xf32, #tpu.memory_space<smem>>
    %c1 = arith.constant 1 : index
    %116 = memref.load %arg9[%c1] : memref<3xf32, #tpu.memory_space<smem>>
    %117 = arith.subf %75, %98 : f32
    %cst_42 = arith.constant 6.250000e-02 : f32
    %118 = arith.mulf %117, %cst_42 : f32
    %119 = arith.addf %116, %118 : f32
    %c1_43 = arith.constant 1 : index
    %120 = memref.load %arg9[%c1_43] : memref<3xf32, #tpu.memory_space<smem>>
    memref.store %119, %arg9[%c1_43] : memref<3xf32, #tpu.memory_space<smem>>
    %c2 = arith.constant 2 : index
    %121 = memref.load %arg9[%c2] : memref<3xf32, #tpu.memory_space<smem>>
    %122 = arith.subf %79, %107 : f32
    %cst_44 = arith.constant 6.250000e-02 : f32
    %123 = arith.mulf %122, %cst_44 : f32
    %124 = arith.addf %121, %123 : f32
    %c2_45 = arith.constant 2 : index
    %125 = memref.load %arg9[%c2_45] : memref<3xf32, #tpu.memory_space<smem>>
    memref.store %124, %arg9[%c2_45] : memref<3xf32, #tpu.memory_space<smem>>
    %c1_i32 = arith.constant 1 : i32
    %126 = arith.cmpi eq, %arg0, %c1_i32 : i32
    %127 = arith.extui %126 : i1 to i32
    %c0_i32_46 = arith.constant 0 : i32
    %128 = arith.cmpi ne, %127, %c0_i32_46 : i32
    scf.if %128 {
      %c0_47 = arith.constant 0 : index
      %129 = memref.load %arg9[%c0_47] : memref<3xf32, #tpu.memory_space<smem>>
      %c1_48 = arith.constant 1 : index
      %130 = memref.load %arg9[%c1_48] : memref<3xf32, #tpu.memory_space<smem>>
      %c2_49 = arith.constant 2 : index
      %131 = memref.load %arg9[%c2_49] : memref<3xf32, #tpu.memory_space<smem>>
      %c0_50 = arith.constant 0 : index
      %132 = memref.load %arg8[%c0_50] : memref<4xf32, #tpu.memory_space<smem>>
      memref.store %129, %arg8[%c0_50] : memref<4xf32, #tpu.memory_space<smem>>
      %c1_51 = arith.constant 1 : index
      %133 = memref.load %arg8[%c1_51] : memref<4xf32, #tpu.memory_space<smem>>
      memref.store %130, %arg8[%c1_51] : memref<4xf32, #tpu.memory_space<smem>>
      %c2_52 = arith.constant 2 : index
      %134 = memref.load %arg8[%c2_52] : memref<4xf32, #tpu.memory_space<smem>>
      memref.store %131, %arg8[%c2_52] : memref<4xf32, #tpu.memory_space<smem>>
      %135 = arith.addf %129, %130 : f32
      %136 = arith.addf %135, %131 : f32
      %c3 = arith.constant 3 : index
      %137 = memref.load %arg8[%c3] : memref<4xf32, #tpu.memory_space<smem>>
      memref.store %136, %arg8[%c3] : memref<4xf32, #tpu.memory_space<smem>>
    } else {
    }
    return
  }
  func.func @transform_0(%arg0: i32) -> (i32, i32) {
    %c0_i32 = arith.constant 0 : i32
    %c0_i32_0 = arith.constant 0 : i32
    return %arg0, %c0_i32 : i32, i32
  }
  func.func @transform_1(%arg0: i32) -> (i32, i32) {
    %c0_i32 = arith.constant 0 : i32
    %c0_i32_0 = arith.constant 0 : i32
    return %arg0, %c0_i32 : i32, i32
  }
  func.func @transform_2(%arg0: i32) -> (i32, i32) {
    %c0_i32 = arith.constant 0 : i32
    %c0_i32_0 = arith.constant 0 : i32
    %c0_i32_1 = arith.constant 0 : i32
    return %c0_i32, %c0_i32_0 : i32, i32
  }
  func.func @transform_3(%arg0: i32) -> (i32, i32) {
    %c0_i32 = arith.constant 0 : i32
    %c0_i32_0 = arith.constant 0 : i32
    %c0_i32_1 = arith.constant 0 : i32
    return %c0_i32, %c0_i32_0 : i32, i32
  }
  func.func @transform_4(%arg0: i32) -> (i32, i32) {
    %c0_i32 = arith.constant 0 : i32
    %c0_i32_0 = arith.constant 0 : i32
    %c0_i32_1 = arith.constant 0 : i32
    return %c0_i32, %c0_i32_0 : i32, i32
  }
  func.func @transform_5(%arg0: i32) -> (i32, i32) {
    %c0_i32 = arith.constant 0 : i32
    %c0_i32_0 = arith.constant 0 : i32
    %c0_i32_1 = arith.constant 0 : i32
    return %c0_i32, %c0_i32_0 : i32, i32
  }
  func.func @transform_6(%arg0: i32) -> (i32, i32) {
    %c0_i32 = arith.constant 0 : i32
    %c0_i32_0 = arith.constant 0 : i32
    return %arg0, %c0_i32 : i32, i32
  }
  func.func @transform_7(%arg0: i32) -> i32 {
    %c0_i32 = arith.constant 0 : i32
    %c0_i32_0 = arith.constant 0 : i32
    return %c0_i32 : i32
  }
}

</mosaic_0001>

<llo_original>
// kernel: _run_kernel.1
$region0: #{_run_kernel.1}
  #allocation0 [shape = 'u32[]', space=smem, size = 0x4, offset = 0x4, fixed_abs, tag = 'smem constant byte address 0x4 - core index']
  #allocation1 [shape = 'u32[144,128]{1,0:T(1,128)}', space=vmem, size = 0x12000, scoped, tag = 'internal scratch']
  #allocation2 [shape = 'f32[3]{0:T(128)}', space=smem, size = 0x200, scoped, tag = 'scratch operand']
  %s0 = inlined_call_operand.vmem [shape: s32[16,3], index: 0, kind: input, shape index: {}]
  %s1 = inlined_call_operand.hbm [shape: bf16[16,1024], index: 1, kind: input, shape index: {}]
  %s2 = inlined_call_operand.hbm [shape: bf16[1024,128], index: 2, kind: input, shape index: {}]
  %s3 = inlined_call_operand.vmem [shape: f32[1,128], index: 3, kind: input, shape index: {}]
  %s4 = inlined_call_operand.hbm [shape: bf16[128,256], index: 4, kind: input, shape index: {}]
  %s5 = inlined_call_operand.vmem [shape: f32[1,256], index: 5, kind: input, shape index: {}]
  %s6 = inlined_call_operand.hbm [shape: f32[16,256], index: 6, kind: output, shape index: {0}]
  %s7 = inlined_call_operand.hbm [shape: f32[4], index: 7, kind: output, shape index: {1}]
  %8 = xla_tuple %s6, %s7
  %s9 = sld [smem:[#allocation0]]
  $region85: #{_run_kernel.1} parent=0
    _
  %s11 = ssub.s32 1, %s9
  %s12 = scalar_select 0, %s11, %s9
  $region1: #{_run_kernel.1} parent=0
    #allocation3 [shape = 'u8[32768]{0}', space=vmem, size = 0x8000, scoped, tag = 'input window, operand 1']
    #allocation4 [shape = 's32[2]{0}', space=sflag, size = 0x8, scoped, tag = 'scoped memory for _run_kernel.1']
    #allocation5 [shape = 's32[2]{0}', space=sflag, size = 0x8, scoped, tag = 'scoped memory for _run_kernel.1']
    #allocation6 [shape = 's32[2]{0}', space=sflag, size = 0x8, scoped, tag = 'scoped memory for _run_kernel.1']
    #allocation7 [shape = 'u8[262144]{0}', space=vmem, size = 0x40000, scoped, tag = 'input window, operand 2, single buffered']
    #allocation8 [shape = 's32[1]{0}', space=sflag, size = 0x4, scoped, tag = 'scoped memory for _run_kernel.1']
    #allocation9 [shape = 'u8[65536]{0}', space=vmem, size = 0x10000, scoped, tag = 'input window, operand 4, single buffered']
    #allocation10 [shape = 'u8[16384]{0}', space=vmem, size = 0x4000, scoped, tag = 'output window, operand 0']
    #allocation11 [shape = 'u8[512]{0}', space=smem, size = 0x200, scoped, tag = 'output window, operand 1, single buffered']
    %13 = vsyncpa [#allocation4], 0
    %s14 = scalar_lea.sflag [#allocation4], 1
    %15 = vsyncpa %s14, 0
    %16 = vsyncpa [#allocation8], 0
    %17 = vsyncpa [#allocation5], 0
    %s18 = scalar_lea.sflag [#allocation5], 1
    %19 = vsyncpa %s18, 0
    %20 = vsyncpa [#allocation6], 0
    loop: start=0, step=1, limit=4
    $region2: #{_run_kernel.1} parent=1 // loop_pre_header
      _
    $region3: #{_run_kernel.1} parent=1 // loop_header
      %s22 = sphi 0, %s26
      %p23 = scmp.ge.s32.totalorder %s22, 4
      %s32 = sphi 0, %s34
      %s35 = sphi 0, %s32
      %s36 = sphi 0, %s35
      %s52 = sphi 0, %s36
      %s58 = sphi 0, %s60
      %s61 = sphi 0, %s58
      %s62 = sphi 0, %s61
      %s78 = sphi 0, %s62
      %s82 = sphi 0, %s82
      %s84 = sphi 0, %s82
      %s85 = sphi 0, %s84
      %s99 = sphi 0, %s85
      %s103 = sphi 0, %s103
      %s105 = sphi 0, %s103
      %s106 = sphi 0, %s105
      %s120 = sphi 0, %s106
      %s124 = sphi 0, %s124
      %s126 = sphi 0, %s124
      %s127 = sphi 0, %s126
      %s141 = sphi 0, %s127
      %s145 = sphi 0, %s145
      %s147 = sphi 0, %s145
      %s148 = sphi 0, %s147
      %s162 = sphi 0, %s148
      %s168 = sphi 0, %s170
      %s171 = sphi 0, %s168
      %s172 = sphi 0, %s171
      %s188 = sphi 0, %s172
      %s192 = sphi 0, %s192
      %s194 = sphi 0, %s192
      %s195 = sphi 0, %s194
      %s209 = sphi 0, %s195
    $region4: #{_run_kernel.1} parent=1 // loop_header_branch
      %25 = sbr.rel (%p23) target = $region8
    $region5: #{_run_kernel.1} parent=1 // loop_body
      %s27 = ssub.s32 %s22, 1
      %s28 = ssub.s32 %s22, 2
      %s29 = sadd.s32 %s22, 1
      %s30 = ssub.s32 %s22, %s29
      %p31 = scmp.eq.s32.totalorder %s30, 0
      %s33 = sadd.s32 %s32, 1
      %s34 = scalar_select %p31, %s32, %s33
      %p37 = pneg %p31
      %p38 = scmp.eq.s32.totalorder %s22, 1
      %p39 = por %p37, %p38
      %p40 = scmp.ne.s32.totalorder %s32, %s35
      %p41 = scmp.eq.s32.totalorder %s22, 0
      %p42 = por %p40, %p41
      %p43 = scmp.ne.s32.totalorder %s32, %s35
      %p44 = scmp.eq.s32.totalorder %s27, 1
      %p45 = por %p43, %p44
      %p46 = scmp.ne.s32.totalorder %s35, %s36
      %p47 = scmp.eq.s32.totalorder %s27, 0
      %p48 = por %p46, %p47
      %p49 = scmp.ne.s32.totalorder %s35, %s36
      %p50 = scmp.eq.s32.totalorder %s28, 1
      %p51 = por %p49, %p50
      %p53 = scmp.ne.s32.totalorder %s36, %s52
      %p54 = scmp.eq.s32.totalorder %s28, 0
      %p55 = por %p53, %p54
      %s56 = ssub.s32 %s22, %s29
      %p57 = scmp.eq.s32.totalorder %s56, 0
      %s59 = sadd.s32 %s58, 1
      %s60 = scalar_select %p57, %s58, %s59
      %p63 = pneg %p57
      %p64 = scmp.eq.s32.totalorder %s22, 1
      %p65 = por %p63, %p64
      %p66 = scmp.ne.s32.totalorder %s58, %s61
      %p67 = scmp.eq.s32.totalorder %s22, 0
      %p68 = por %p66, %p67
      %p69 = scmp.ne.s32.totalorder %s58, %s61
      %p70 = scmp.eq.s32.totalorder %s27, 1
      %p71 = por %p69, %p70
      %p72 = scmp.ne.s32.totalorder %s61, %s62
      %p73 = scmp.eq.s32.totalorder %s27, 0
      %p74 = por %p72, %p73
      %p75 = scmp.ne.s32.totalorder %s61, %s62
      %p76 = scmp.eq.s32.totalorder %s28, 1
      %p77 = por %p75, %p76
      %p79 = scmp.ne.s32.totalorder %s62, %s78
      %p80 = scmp.eq.s32.totalorder %s28, 0
      %p81 = por %p79, %p80
      %s83 = sadd.s32 %s82, 1
      %p86 = scmp.eq.s32.totalorder %s22, 1
      %p87 = scmp.ne.s32.totalorder %s82, %s84
      %p88 = scmp.eq.s32.totalorder %s22, 0
      %p89 = por %p87, %p88
      %p90 = scmp.ne.s32.totalorder %s82, %s84
      %p91 = scmp.eq.s32.totalorder %s27, 1
      %p92 = por %p90, %p91
      %p93 = scmp.ne.s32.totalorder %s84, %s85
      %p94 = scmp.eq.s32.totalorder %s27, 0
      %p95 = por %p93, %p94
      %p96 = scmp.ne.s32.totalorder %s84, %s85
      %p97 = scmp.eq.s32.totalorder %s28, 1
      %p98 = por %p96, %p97
      %p100 = scmp.ne.s32.totalorder %s85, %s99
      %p101 = scmp.eq.s32.totalorder %s28, 0
      %p102 = por %p100, %p101
      %s104 = sadd.s32 %s103, 1
      %p107 = scmp.eq.s32.totalorder %s22, 1
      %p108 = scmp.ne.s32.totalorder %s103, %s105
      %p109 = scmp.eq.s32.totalorder %s22, 0
      %p110 = por %p108, %p109
      %p111 = scmp.ne.s32.totalorder %s103, %s105
      %p112 = scmp.eq.s32.totalorder %s27, 1
      %p113 = por %p111, %p112
      %p114 = scmp.ne.s32.totalorder %s105, %s106
      %p115 = scmp.eq.s32.totalorder %s27, 0
      %p116 = por %p114, %p115
      %p117 = scmp.ne.s32.totalorder %s105, %s106
      %p118 = scmp.eq.s32.totalorder %s28, 1
      %p119 = por %p117, %p118
      %p121 = scmp.ne.s32.totalorder %s106, %s120
      %p122 = scmp.eq.s32.totalorder %s28, 0
      %p123 = por %p121, %p122
      %s125 = sadd.s32 %s124, 1
      %p128 = scmp.eq.s32.totalorder %s22, 1
      %p129 = scmp.ne.s32.totalorder %s124, %s126
      %p130 = scmp.eq.s32.totalorder %s22, 0
      %p131 = por %p129, %p130
      %p132 = scmp.ne.s32.totalorder %s124, %s126
      %p133 = scmp.eq.s32.totalorder %s27, 1
      %p134 = por %p132, %p133
      %p135 = scmp.ne.s32.totalorder %s126, %s127
      %p136 = scmp.eq.s32.totalorder %s27, 0
      %p137 = por %p135, %p136
      %p138 = scmp.ne.s32.totalorder %s126, %s127
      %p139 = scmp.eq.s32.totalorder %s28, 1
      %p140 = por %p138, %p139
      %p142 = scmp.ne.s32.totalorder %s127, %s141
      %p143 = scmp.eq.s32.totalorder %s28, 0
      %p144 = por %p142, %p143
      %s146 = sadd.s32 %s145, 1
      %p149 = scmp.eq.s32.totalorder %s22, 1
      %p150 = scmp.ne.s32.totalorder %s145, %s147
      %p151 = scmp.eq.s32.totalorder %s22, 0
      %p152 = por %p150, %p151
      %p153 = scmp.ne.s32.totalorder %s145, %s147
      %p154 = scmp.eq.s32.totalorder %s27, 1
      %p155 = por %p153, %p154
      %p156 = scmp.ne.s32.totalorder %s147, %s148
      %p157 = scmp.eq.s32.totalorder %s27, 0
      %p158 = por %p156, %p157
      %p159 = scmp.ne.s32.totalorder %s147, %s148
      %p160 = scmp.eq.s32.totalorder %s28, 1
      %p161 = por %p159, %p160
      %p163 = scmp.ne.s32.totalorder %s148, %s162
      %p164 = scmp.eq.s32.totalorder %s28, 0
      %p165 = por %p163, %p164
      %s166 = ssub.s32 %s22, %s29
      %p167 = scmp.eq.s32.totalorder %s166, 0
      %s169 = sadd.s32 %s168, 1
      %s170 = scalar_select %p167, %s168, %s169
      %p173 = pneg %p167
      %p174 = scmp.eq.s32.totalorder %s22, 1
      %p175 = por %p173, %p174
      %p176 = scmp.ne.s32.totalorder %s168, %s171
      %p177 = scmp.eq.s32.totalorder %s22, 0
      %p178 = por %p176, %p177
      %p179 = scmp.ne.s32.totalorder %s168, %s171
      %p180 = scmp.eq.s32.totalorder %s27, 1
      %p181 = por %p179, %p180
      %p182 = scmp.ne.s32.totalorder %s171, %s172
      %p183 = scmp.eq.s32.totalorder %s27, 0
      %p184 = por %p182, %p183
      %p185 = scmp.ne.s32.totalorder %s171, %s172
      %p186 = scmp.eq.s32.totalorder %s28, 1
      %p187 = por %p185, %p186
      %p189 = scmp.ne.s32.totalorder %s172, %s188
      %p190 = scmp.eq.s32.totalorder %s28, 0
      %p191 = por %p189, %p190
      %s193 = sadd.s32 %s192, 1
      %p196 = scmp.eq.s32.totalorder %s22, 1
      %p197 = scmp.ne.s32.totalorder %s192, %s194
      %p198 = scmp.eq.s32.totalorder %s22, 0
      %p199 = por %p197, %p198
      %p200 = scmp.ne.s32.totalorder %s192, %s194
      %p201 = scmp.eq.s32.totalorder %s27, 1
      %p202 = por %p200, %p201
      %p203 = scmp.ne.s32.totalorder %s194, %s195
      %p204 = scmp.eq.s32.totalorder %s27, 0
      %p205 = por %p203, %p204
      %p206 = scmp.ne.s32.totalorder %s194, %s195
      %p207 = scmp.eq.s32.totalorder %s28, 1
      %p208 = por %p206, %p207
      %p210 = scmp.ne.s32.totalorder %s195, %s209
      %p211 = scmp.eq.s32.totalorder %s28, 0
      %p212 = por %p210, %p211
      %p213 = scmp.le.s32.totalorder 1, %s22
      %p214 = scmp.lt.s32.totalorder %s22, 3
      %p215 = pnand %p213, %p214
      %p216 = pneg %p215
      // Predicated region
      $region9: #{_run_kernel.1} parent=5 // pred_check
        _
      $region10: #{_run_kernel.1} parent=5 // pred_check_branch
        %218 = sbr.rel (%p215) target = $region12
      $region11: #{_run_kernel.1} parent=5 // pred_region
        %s219 = ssub.s32 %s22, 1
        // Predicated region
        $region13: #{_run_kernel.1} parent=11 // pred_check
          %p220 = pneg %p95
        $region14: #{_run_kernel.1} parent=11 // pred_check_branch
          %222 = sbr.rel (%p220) target = $region16
        $region15: #{_run_kernel.1} parent=11 // pred_region
          %s224 = ssub.s32 8192, 8192
          %225 = vsyncadd [#allocation8], %s224
          %s226 = sshll.u32 [#allocation7], 4
          %s227 = int_to_ptr.vmem [resolvable:$true] %s226
          %232 = dma.hbm_to_vmem [thread:$0]  %s2, 8192, %s227, [#allocation8], 64, 64, 4
        $region16: #{_run_kernel.1} parent=11 // pred_fallthru
          _
        // Predicated region
        $region17: #{_run_kernel.1} parent=11 // pred_check
          %p233 = pneg %p116
        $region18: #{_run_kernel.1} parent=11 // pred_check_branch
          %235 = sbr.rel (%p233) target = $region20
        $region19: #{_run_kernel.1} parent=11 // pred_region
          _
        $region20: #{_run_kernel.1} parent=11 // pred_fallthru
          _
        // Predicated region
        $region21: #{_run_kernel.1} parent=11 // pred_check
          %p236 = pneg %p137
        $region22: #{_run_kernel.1} parent=11 // pred_check_branch
          %238 = sbr.rel (%p236) target = $region24
        $region23: #{_run_kernel.1} parent=11 // pred_region
          %s240 = ssub.s32 2048, 2048
          %241 = vsyncadd [#allocation8], %s240
          %s242 = sshll.u32 [#allocation9], 4
          %s243 = int_to_ptr.vmem [resolvable:$true] %s242
          %248 = dma.hbm_to_vmem [thread:$0]  %s4, 2048, %s243, [#allocation8], 128, 128, 8
        $region24: #{_run_kernel.1} parent=11 // pred_fallthru
          _
        // Predicated region
        $region25: #{_run_kernel.1} parent=11 // pred_check
          %p249 = pneg %p158
        $region26: #{_run_kernel.1} parent=11 // pred_check_branch
          %251 = sbr.rel (%p249) target = $region28
        $region27: #{_run_kernel.1} parent=11 // pred_region
          _
        $region28: #{_run_kernel.1} parent=11 // pred_fallthru
          _
      $region12: #{_run_kernel.1} parent=5 // pred_fallthru
        _
      %p252 = scmp.lt.s32.totalorder %s22, 2
      // Predicated region
      $region29: #{_run_kernel.1} parent=5 // pred_check
        %p253 = pneg %p252
      $region30: #{_run_kernel.1} parent=5 // pred_check_branch
        %255 = sbr.rel (%p253) target = $region32
      $region31: #{_run_kernel.1} parent=5 // pred_region
        // Predicated region
        $region33: #{_run_kernel.1} parent=31 // pred_check
          %p256 = pneg %p42
        $region34: #{_run_kernel.1} parent=31 // pred_check_branch
          %258 = sbr.rel (%p256) target = $region36
        $region35: #{_run_kernel.1} parent=31 // pred_region
          %p259 = scmp.lt.s32.totalorder %s22, 1
          %s260 = scalar_select %p259, %s22, 1
          %s261 = smul.addr %s260, 8
          %s262 = scalar_lea.vmem %s0, %s261
        $region36: #{_run_kernel.1} parent=31 // pred_fallthru
          _
        // Predicated region
        $region37: #{_run_kernel.1} parent=31 // pred_check
          %p263 = pneg %p68
        $region38: #{_run_kernel.1} parent=31 // pred_check_branch
          %265 = sbr.rel (%p263) target = $region40
        $region39: #{_run_kernel.1} parent=31 // pred_region
          %s266 = sand.u32 %s58, 1
          %s267 = scalar_lea.sflag [#allocation4], %s266
          %s268 = sand.u32 %s58, 1
          %s269 = smul.addr %s268, 32
          %s270 = scalar_lea.vmem [#allocation3], %s269
          %s272 = ssub.s32 512, 512
          %273 = vsyncadd %s267, %s272
          %s274 = smul.addr %s22, 8
          %s275 = smul.addr %s274, 64
          %s276 = scalar_lea.hbm %s1, %s275
          %s278 = sshll.u32 %s270, 4
          %s279 = int_to_ptr.vmem [resolvable:$true] %s278
          %281 = dma.hbm_to_vmem [thread:$0]  %s276, 512, %s279, %s267
        $region40: #{_run_kernel.1} parent=31 // pred_fallthru
          _
      $region32: #{_run_kernel.1} parent=5 // pred_fallthru
        _
      %p282 = scmp.le.s32.totalorder 1, %s22
      %p283 = scmp.lt.s32.totalorder %s22, 3
      %p284 = pnand %p282, %p283
      %p285 = pneg %p284
      // Predicated region
      $region41: #{_run_kernel.1} parent=5 // pred_check
        _
      $region42: #{_run_kernel.1} parent=5 // pred_check_branch
        %287 = sbr.rel (%p284) target = $region44
      $region43: #{_run_kernel.1} parent=5 // pred_region
        %s288 = ssub.s32 %s22, 1
        %s289 = sand.u32 %s61, 1
        %s290 = scalar_lea.sflag [#allocation4], %s289
        %s291 = sand.u32 %s61, 1
        %s292 = smul.addr %s291, 32
        %s293 = scalar_lea.vmem [#allocation3], %s292
        // Predicated region
        $region45: #{_run_kernel.1} parent=43 // pred_check
          %p294 = pneg %p74
        $region46: #{_run_kernel.1} parent=43 // pred_check_branch
          %296 = sbr.rel (%p294) target = $region48
        $region47: #{_run_kernel.1} parent=43 // pred_region
          %297 = dma.done %s290, 512
        $region48: #{_run_kernel.1} parent=43 // pred_fallthru
          _
        // Predicated region
        $region49: #{_run_kernel.1} parent=43 // pred_check
          %p298 = pneg %p95
        $region50: #{_run_kernel.1} parent=43 // pred_check_branch
          %300 = sbr.rel (%p298) target = $region52
        $region51: #{_run_kernel.1} parent=43 // pred_region
          %301 = dma.done [#allocation8], 8192
        $region52: #{_run_kernel.1} parent=43 // pred_fallthru
          _
        // Predicated region
        $region53: #{_run_kernel.1} parent=43 // pred_check
          %p302 = pneg %p137
        $region54: #{_run_kernel.1} parent=43 // pred_check_branch
          %304 = sbr.rel (%p302) target = $region56
        $region55: #{_run_kernel.1} parent=43 // pred_region
          %305 = dma.done [#allocation8], 2048
        $region56: #{_run_kernel.1} parent=43 // pred_fallthru
          _
        %p306 = scmp.lt.s32.totalorder %s27, 1
        %s307 = scalar_select %p306, %s27, 1
        %s308 = smul.addr %s307, 8
        %s309 = scalar_lea.vmem %s0, %s308
        %p310 = pneg %p48
        %p311 = pneg %p45
        %s312 = sand.u32 %s61, 1
        %s313 = scalar_lea.sflag [#allocation4], %s312
        %s314 = sand.u32 %s61, 1
        %s315 = smul.addr %s314, 32
        %s316 = scalar_lea.vmem [#allocation3], %s315
        %p317 = pneg %p74
        %p318 = pneg %p71
        %p319 = pneg %p95
        %p320 = pneg %p92
        %p321 = pneg %p116
        %p322 = pneg %p113
        %p323 = pneg %p137
        %p324 = pneg %p134
        %p325 = pneg %p158
        %p326 = pneg %p155
        %p327 = pneg %p184
        %p328 = pneg %p181
        %s329 = sand.u32 %s171, 1
        %s330 = scalar_lea.sflag [#allocation5], %s329
        %s331 = sand.u32 %s171, 1
        %s332 = smul.addr %s331, 16
        %s333 = scalar_lea.vmem [#allocation10], %s332
        %p334 = pneg %p205
        %p335 = pneg %p202
        %p336 = scmp.lt.s32.totalorder %s27, 1
        %s337 = scalar_select %p336, %s27, 1
        %s338 = smul.addr %s337, 8
        %s339 = scalar_lea.vmem %s0, %s338
        %v341 = vld [vmem:[%s293] sm:$0xff]
        %v342 = vld [vmem:[%s293 + $0x8] sm:$0xff]
        %v343 = vld [vmem:[%s293 + $0x10] sm:$0xff]
        %v344 = vld [vmem:[%s293 + $0x18] sm:$0xff]
        %v345 = vld [vmem:[#allocation7] sm:$0xf]
        %v346 = vld [vmem:[#allocation7 + $0x4] sm:$0xf]
        %v347 = vld [vmem:[#allocation7 + $0x8] sm:$0xf]
        %v348 = vld [vmem:[#allocation7 + $0xc] sm:$0xf]
        %v349 = vld [vmem:[#allocation7 + $0x10] sm:$0xf]
        %v350 = vld [vmem:[#allocation7 + $0x14] sm:$0xf]
        %v351 = vld [vmem:[#allocation7 + $0x18] sm:$0xf]
        %v352 = vld [vmem:[#allocation7 + $0x1c] sm:$0xf]
        %v353 = vld [vmem:[#allocation7 + $0x20] sm:$0xf]
        %v354 = vld [vmem:[#allocation7 + $0x24] sm:$0xf]
        %v355 = vld [vmem:[#allocation7 + $0x28] sm:$0xf]
        %v356 = vld [vmem:[#allocation7 + $0x2c] sm:$0xf]
        %v357 = vld [vmem:[#allocation7 + $0x30] sm:$0xf]
        %v358 = vld [vmem:[#allocation7 + $0x34] sm:$0xf]
        %v359 = vld [vmem:[#allocation7 + $0x38] sm:$0xf]
        %v360 = vld [vmem:[#allocation7 + $0x3c] sm:$0xf]
        %v361 = vld [vmem:[#allocation7 + $0x40] sm:$0xf]
        %v362 = vld [vmem:[#allocation7 + $0x44] sm:$0xf]
        %v363 = vld [vmem:[#allocation7 + $0x48] sm:$0xf]
        %v364 = vld [vmem:[#allocation7 + $0x4c] sm:$0xf]
        %v365 = vld [vmem:[#allocation7 + $0x50] sm:$0xf]
        %v366 = vld [vmem:[#allocation7 + $0x54] sm:$0xf]
        %v367 = vld [vmem:[#allocation7 + $0x58] sm:$0xf]
        %v368 = vld [vmem:[#allocation7 + $0x5c] sm:$0xf]
        %v369 = vld [vmem:[#allocation7 + $0x60] sm:$0xf]
        %v370 = vld [vmem:[#allocation7 + $0x64] sm:$0xf]
        %v371 = vld [vmem:[#allocation7 + $0x68] sm:$0xf]
        %v372 = vld [vmem:[#allocation7 + $0x6c] sm:$0xf]
        %v373 = vld [vmem:[#allocation7 + $0x70] sm:$0xf]
        %v374 = vld [vmem:[#allocation7 + $0x74] sm:$0xf]
        %v375 = vld [vmem:[#allocation7 + $0x78] sm:$0xf]
        %v376 = vld [vmem:[#allocation7 + $0x7c] sm:$0xf]
        %v377 = vld [vmem:[#allocation7 + $0x80] sm:$0xf]
        %v378 = vld [vmem:[#allocation7 + $0x84] sm:$0xf]
        %v379 = vld [vmem:[#allocation7 + $0x88] sm:$0xf]
        %v380 = vld [vmem:[#allocation7 + $0x8c] sm:$0xf]
        %v381 = vld [vmem:[#allocation7 + $0x90] sm:$0xf]
        %v382 = vld [vmem:[#allocation7 + $0x94] sm:$0xf]
        %v383 = vld [vmem:[#allocation7 + $0x98] sm:$0xf]
        %v384 = vld [vmem:[#allocation7 + $0x9c] sm:$0xf]
        %v385 = vld [vmem:[#allocation7 + $0xa0] sm:$0xf]
        %v386 = vld [vmem:[#allocation7 + $0xa4] sm:$0xf]
        %v387 = vld [vmem:[#allocation7 + $0xa8] sm:$0xf]
        %v388 = vld [vmem:[#allocation7 + $0xac] sm:$0xf]
        %v389 = vld [vmem:[#allocation7 + $0xb0] sm:$0xf]
        %v390 = vld [vmem:[#allocation7 + $0xb4] sm:$0xf]
        %v391 = vld [vmem:[#allocation7 + $0xb8] sm:$0xf]
        %v392 = vld [vmem:[#allocation7 + $0xbc] sm:$0xf]
        %v393 = vld [vmem:[#allocation7 + $0xc0] sm:$0xf]
        %v394 = vld [vmem:[#allocation7 + $0xc4] sm:$0xf]
        %v395 = vld [vmem:[#allocation7 + $0xc8] sm:$0xf]
        %v396 = vld [vmem:[#allocation7 + $0xcc] sm:$0xf]
        %v397 = vld [vmem:[#allocation7 + $0xd0] sm:$0xf]
        %v398 = vld [vmem:[#allocation7 + $0xd4] sm:$0xf]
        %v399 = vld [vmem:[#allocation7 + $0xd8] sm:$0xf]
        %v400 = vld [vmem:[#allocation7 + $0xdc] sm:$0xf]
        %v401 = vld [vmem:[#allocation7 + $0xe0] sm:$0xf]
        %v402 = vld [vmem:[#allocation7 + $0xe4] sm:$0xf]
        %v403 = vld [vmem:[#allocation7 + $0xe8] sm:$0xf]
        %v404 = vld [vmem:[#allocation7 + $0xec] sm:$0xf]
        %v405 = vld [vmem:[#allocation7 + $0xf0] sm:$0xf]
        %v406 = vld [vmem:[#allocation7 + $0xf4] sm:$0xf]
        %v407 = vld [vmem:[#allocation7 + $0xf8] sm:$0xf]
        %v408 = vld [vmem:[#allocation7 + $0xfc] sm:$0xf]
        %v409 = vld [vmem:[#allocation7 + $0x100] sm:$0xf]
        %v410 = vld [vmem:[#allocation7 + $0x104] sm:$0xf]
        %v411 = vld [vmem:[#allocation7 + $0x108] sm:$0xf]
        %v412 = vld [vmem:[#allocation7 + $0x10c] sm:$0xf]
        %v413 = vld [vmem:[#allocation7 + $0x110] sm:$0xf]
        %v414 = vld [vmem:[#allocation7 + $0x114] sm:$0xf]
        %v415 = vld [vmem:[#allocation7 + $0x118] sm:$0xf]
        %v416 = vld [vmem:[#allocation7 + $0x11c] sm:$0xf]
        %v417 = vld [vmem:[#allocation7 + $0x120] sm:$0xf]
        %v418 = vld [vmem:[#allocation7 + $0x124] sm:$0xf]
        %v419 = vld [vmem:[#allocation7 + $0x128] sm:$0xf]
        %v420 = vld [vmem:[#allocation7 + $0x12c] sm:$0xf]
        %v421 = vld [vmem:[#allocation7 + $0x130] sm:$0xf]
        %v422 = vld [vmem:[#allocation7 + $0x134] sm:$0xf]
        %v423 = vld [vmem:[#allocation7 + $0x138] sm:$0xf]
        %v424 = vld [vmem:[#allocation7 + $0x13c] sm:$0xf]
        %v425 = vld [vmem:[#allocation7 + $0x140] sm:$0xf]
        %v426 = vld [vmem:[#allocation7 + $0x144] sm:$0xf]
        %v427 = vld [vmem:[#allocation7 + $0x148] sm:$0xf]
        %v428 = vld [vmem:[#allocation7 + $0x14c] sm:$0xf]
        %v429 = vld [vmem:[#allocation7 + $0x150] sm:$0xf]
        %v430 = vld [vmem:[#allocation7 + $0x154] sm:$0xf]
        %v431 = vld [vmem:[#allocation7 + $0x158] sm:$0xf]
        %v432 = vld [vmem:[#allocation7 + $0x15c] sm:$0xf]
        %v433 = vld [vmem:[#allocation7 + $0x160] sm:$0xf]
        %v434 = vld [vmem:[#allocation7 + $0x164] sm:$0xf]
        %v435 = vld [vmem:[#allocation7 + $0x168] sm:$0xf]
        %v436 = vld [vmem:[#allocation7 + $0x16c] sm:$0xf]
        %v437 = vld [vmem:[#allocation7 + $0x170] sm:$0xf]
        %v438 = vld [vmem:[#allocation7 + $0x174] sm:$0xf]
        %v439 = vld [vmem:[#allocation7 + $0x178] sm:$0xf]
        %v440 = vld [vmem:[#allocation7 + $0x17c] sm:$0xf]
        %v441 = vld [vmem:[#allocation7 + $0x180] sm:$0xf]
        %v442 = vld [vmem:[#allocation7 + $0x184] sm:$0xf]
        %v443 = vld [vmem:[#allocation7 + $0x188] sm:$0xf]
        %v444 = vld [vmem:[#allocation7 + $0x18c] sm:$0xf]
        %v445 = vld [vmem:[#allocation7 + $0x190] sm:$0xf]
        %v446 = vld [vmem:[#allocation7 + $0x194] sm:$0xf]
        %v447 = vld [vmem:[#allocation7 + $0x198] sm:$0xf]
        %v448 = vld [vmem:[#allocation7 + $0x19c] sm:$0xf]
        %v449 = vld [vmem:[#allocation7 + $0x1a0] sm:$0xf]
        %v450 = vld [vmem:[#allocation7 + $0x1a4] sm:$0xf]
        %v451 = vld [vmem:[#allocation7 + $0x1a8] sm:$0xf]
        %v452 = vld [vmem:[#allocation7 + $0x1ac] sm:$0xf]
        %v453 = vld [vmem:[#allocation7 + $0x1b0] sm:$0xf]
        %v454 = vld [vmem:[#allocation7 + $0x1b4] sm:$0xf]
        %v455 = vld [vmem:[#allocation7 + $0x1b8] sm:$0xf]
        %v456 = vld [vmem:[#allocation7 + $0x1bc] sm:$0xf]
        %v457 = vld [vmem:[#allocation7 + $0x1c0] sm:$0xf]
        %v458 = vld [vmem:[#allocation7 + $0x1c4] sm:$0xf]
        %v459 = vld [vmem:[#allocation7 + $0x1c8] sm:$0xf]
        %v460 = vld [vmem:[#allocation7 + $0x1cc] sm:$0xf]
        %v461 = vld [vmem:[#allocation7 + $0x1d0] sm:$0xf]
        %v462 = vld [vmem:[#allocation7 + $0x1d4] sm:$0xf]
        %v463 = vld [vmem:[#allocation7 + $0x1d8] sm:$0xf]
        %v464 = vld [vmem:[#allocation7 + $0x1dc] sm:$0xf]
        %v465 = vld [vmem:[#allocation7 + $0x1e0] sm:$0xf]
        %v466 = vld [vmem:[#allocation7 + $0x1e4] sm:$0xf]
        %v467 = vld [vmem:[#allocation7 + $0x1e8] sm:$0xf]
        %v468 = vld [vmem:[#allocation7 + $0x1ec] sm:$0xf]
        %v469 = vld [vmem:[#allocation7 + $0x1f0] sm:$0xf]
        %v470 = vld [vmem:[#allocation7 + $0x1f4] sm:$0xf]
        %v471 = vld [vmem:[#allocation7 + $0x1f8] sm:$0xf]
        %v472 = vld [vmem:[#allocation7 + $0x1fc] sm:$0xf]
        %v473 = vld [vmem:[%s3] sm:$0x1]
        %v475 = vlaneseq
        %v476 = vshrl.u32 %v475, 7
        %v477 = vsub.s32 0, %v476
        %v478 = vrot.slane %v473, %v477
        %v484 = vunpack.c.l.b16 %v341
        %v485 = vunpack.c.h.b16 %v341
        %v486 = vunpack.c.l.b16 %v342
        %v487 = vunpack.c.h.b16 %v342
        %v488 = vunpack.c.l.b16 %v343
        %v489 = vunpack.c.h.b16 %v343
        %v490 = vunpack.c.l.b16 %v344
        %v491 = vunpack.c.h.b16 %v344
        %v492 = vpack.c.b16 %v484, %v484
        %v493 = vpack.c.b16 %v485, %v485
        %v494 = vpack.c.b16 %v486, %v486
        %v495 = vpack.c.b16 %v487, %v487
        %v496 = vpack.c.b16 %v488, %v488
        %v497 = vpack.c.b16 %v489, %v489
        %v498 = vpack.c.b16 %v490, %v490
        %v499 = vpack.c.b16 %v491, %v491
        %v636 = vunpack.c.l.b16 %v345
        %v637 = vunpack.c.l.b16 %v346
        %v638 = vunpack.c.l.b16 %v347
        %v639 = vunpack.c.l.b16 %v348
        %v640 = vunpack.c.l.b16 %v349
        %v641 = vunpack.c.l.b16 %v350
        %v642 = vunpack.c.l.b16 %v351
        %v643 = vunpack.c.l.b16 %v352
        %v644 = vunpack.c.l.b16 %v353
        %v645 = vunpack.c.l.b16 %v354
        %v646 = vunpack.c.l.b16 %v355
        %v647 = vunpack.c.l.b16 %v356
        %v648 = vunpack.c.l.b16 %v357
        %v649 = vunpack.c.l.b16 %v358
        %v650 = vunpack.c.l.b16 %v359
        %v651 = vunpack.c.l.b16 %v360
        %v652 = vunpack.c.l.b16 %v361
        %v653 = vunpack.c.l.b16 %v362
        %v654 = vunpack.c.l.b16 %v363
        %v655 = vunpack.c.l.b16 %v364
        %v656 = vunpack.c.l.b16 %v365
        %v657 = vunpack.c.l.b16 %v366
        %v658 = vunpack.c.l.b16 %v367
        %v659 = vunpack.c.l.b16 %v368
        %v660 = vunpack.c.l.b16 %v369
        %v661 = vunpack.c.l.b16 %v370
        %v662 = vunpack.c.l.b16 %v371
        %v663 = vunpack.c.l.b16 %v372
        %v664 = vunpack.c.l.b16 %v373
        %v665 = vunpack.c.l.b16 %v374
        %v666 = vunpack.c.l.b16 %v375
        %v667 = vunpack.c.l.b16 %v376
        %v668 = vunpack.c.l.b16 %v377
        %v669 = vunpack.c.l.b16 %v378
        %v670 = vunpack.c.l.b16 %v379
        %v671 = vunpack.c.l.b16 %v380
        %v672 = vunpack.c.l.b16 %v381
        %v673 = vunpack.c.l.b16 %v382
        %v674 = vunpack.c.l.b16 %v383
        %v675 = vunpack.c.l.b16 %v384
        %v676 = vunpack.c.l.b16 %v385
        %v677 = vunpack.c.l.b16 %v386
        %v678 = vunpack.c.l.b16 %v387
        %v679 = vunpack.c.l.b16 %v388
        %v680 = vunpack.c.l.b16 %v389
        %v681 = vunpack.c.l.b16 %v390
        %v682 = vunpack.c.l.b16 %v391
        %v683 = vunpack.c.l.b16 %v392
        %v684 = vunpack.c.l.b16 %v393
        %v685 = vunpack.c.l.b16 %v394
        %v686 = vunpack.c.l.b16 %v395
        %v687 = vunpack.c.l.b16 %v396
        %v688 = vunpack.c.l.b16 %v397
        %v689 = vunpack.c.l.b16 %v398
        %v690 = vunpack.c.l.b16 %v399
        %v691 = vunpack.c.l.b16 %v400
        %v692 = vunpack.c.l.b16 %v401
        %v693 = vunpack.c.l.b16 %v402
        %v694 = vunpack.c.l.b16 %v403
        %v695 = vunpack.c.l.b16 %v404
        %v696 = vunpack.c.l.b16 %v405
        %v697 = vunpack.c.l.b16 %v406
        %v698 = vunpack.c.l.b16 %v407
        %v699 = vunpack.c.l.b16 %v408
        %v700 = vunpack.c.l.b16 %v409
        %v701 = vunpack.c.l.b16 %v410
        %v702 = vunpack.c.l.b16 %v411
        %v703 = vunpack.c.l.b16 %v412
        %v704 = vunpack.c.l.b16 %v413
        %v705 = vunpack.c.l.b16 %v414
        %v706 = vunpack.c.l.b16 %v415
        %v707 = vunpack.c.l.b16 %v416
        %v708 = vunpack.c.l.b16 %v417
        %v709 = vunpack.c.l.b16 %v418
        %v710 = vunpack.c.l.b16 %v419
        %v711 = vunpack.c.l.b16 %v420
        %v712 = vunpack.c.l.b16 %v421
        %v713 = vunpack.c.l.b16 %v422
        %v714 = vunpack.c.l.b16 %v423
        %v715 = vunpack.c.l.b16 %v424
        %v716 = vunpack.c.l.b16 %v425
        %v717 = vunpack.c.l.b16 %v426
        %v718 = vunpack.c.l.b16 %v427
        %v719 = vunpack.c.l.b16 %v428
        %v720 = vunpack.c.l.b16 %v429
        %v721 = vunpack.c.l.b16 %v430
        %v722 = vunpack.c.l.b16 %v431
        %v723 = vunpack.c.l.b16 %v432
        %v724 = vunpack.c.l.b16 %v433
        %v725 = vunpack.c.l.b16 %v434
        %v726 = vunpack.c.l.b16 %v435
        %v727 = vunpack.c.l.b16 %v436
        %v728 = vunpack.c.l.b16 %v437
        %v729 = vunpack.c.l.b16 %v438
        %v730 = vunpack.c.l.b16 %v439
        %v731 = vunpack.c.l.b16 %v440
        %v732 = vunpack.c.l.b16 %v441
        %v733 = vunpack.c.l.b16 %v442
        %v734 = vunpack.c.l.b16 %v443
        %v735 = vunpack.c.l.b16 %v444
        %v736 = vunpack.c.l.b16 %v445
        %v737 = vunpack.c.l.b16 %v446
        %v738 = vunpack.c.l.b16 %v447
        %v739 = vunpack.c.l.b16 %v448
        %v740 = vunpack.c.l.b16 %v449
        %v741 = vunpack.c.l.b16 %v450
        %v742 = vunpack.c.l.b16 %v451
        %v743 = vunpack.c.l.b16 %v452
        %v744 = vunpack.c.l.b16 %v453
        %v745 = vunpack.c.l.b16 %v454
        %v746 = vunpack.c.l.b16 %v455
        %v747 = vunpack.c.l.b16 %v456
        %v748 = vunpack.c.l.b16 %v457
        %v749 = vunpack.c.l.b16 %v458
        %v750 = vunpack.c.l.b16 %v459
        %v751 = vunpack.c.l.b16 %v460
        %v752 = vunpack.c.l.b16 %v461
        %v753 = vunpack.c.l.b16 %v462
        %v754 = vunpack.c.l.b16 %v463
        %v755 = vunpack.c.l.b16 %v464
        %v756 = vunpack.c.l.b16 %v465
        %v757 = vunpack.c.l.b16 %v466
        %v758 = vunpack.c.l.b16 %v467
        %v759 = vunpack.c.l.b16 %v468
        %v760 = vunpack.c.l.b16 %v469
        %v761 = vunpack.c.l.b16 %v470
        %v762 = vunpack.c.l.b16 %v471
        %v763 = vunpack.c.l.b16 %v472
        %v764 = vpack.c.b16 %v637, %v636
        %v765 = vpack.c.b16 %v639, %v638
        %v766 = vpack.c.b16 %v641, %v640
        %v767 = vpack.c.b16 %v643, %v642
        %v768 = vpack.c.b16 %v645, %v644
        %v769 = vpack.c.b16 %v647, %v646
        %v770 = vpack.c.b16 %v649, %v648
        %v771 = vpack.c.b16 %v651, %v650
        %v772 = vpack.c.b16 %v653, %v652
        %v773 = vpack.c.b16 %v655, %v654
        %v774 = vpack.c.b16 %v657, %v656
        %v775 = vpack.c.b16 %v659, %v658
        %v776 = vpack.c.b16 %v661, %v660
        %v777 = vpack.c.b16 %v663, %v662
        %v778 = vpack.c.b16 %v665, %v664
        %v779 = vpack.c.b16 %v667, %v666
        %v780 = vpack.c.b16 %v669, %v668
        %v781 = vpack.c.b16 %v671, %v670
        %v782 = vpack.c.b16 %v673, %v672
        %v783 = vpack.c.b16 %v675, %v674
        %v784 = vpack.c.b16 %v677, %v676
        %v785 = vpack.c.b16 %v679, %v678
        %v786 = vpack.c.b16 %v681, %v680
        %v787 = vpack.c.b16 %v683, %v682
        %v788 = vpack.c.b16 %v685, %v684
        %v789 = vpack.c.b16 %v687, %v686
        %v790 = vpack.c.b16 %v689, %v688
        %v791 = vpack.c.b16 %v691, %v690
        %v792 = vpack.c.b16 %v693, %v692
        %v793 = vpack.c.b16 %v695, %v694
        %v794 = vpack.c.b16 %v697, %v696
        %v795 = vpack.c.b16 %v699, %v698
        %v796 = vpack.c.b16 %v701, %v700
        %v797 = vpack.c.b16 %v703, %v702
        %v798 = vpack.c.b16 %v705, %v704
        %v799 = vpack.c.b16 %v707, %v706
        %v800 = vpack.c.b16 %v709, %v708
        %v801 = vpack.c.b16 %v711, %v710
        %v802 = vpack.c.b16 %v713, %v712
        %v803 = vpack.c.b16 %v715, %v714
        %v804 = vpack.c.b16 %v717, %v716
        %v805 = vpack.c.b16 %v719, %v718
        %v806 = vpack.c.b16 %v721, %v720
        %v807 = vpack.c.b16 %v723, %v722
        %v808 = vpack.c.b16 %v725, %v724
        %v809 = vpack.c.b16 %v727, %v726
        %v810 = vpack.c.b16 %v729, %v728
        %v811 = vpack.c.b16 %v731, %v730
        %v812 = vpack.c.b16 %v733, %v732
        %v813 = vpack.c.b16 %v735, %v734
        %v814 = vpack.c.b16 %v737, %v736
        %v815 = vpack.c.b16 %v739, %v738
        %v816 = vpack.c.b16 %v741, %v740
        %v817 = vpack.c.b16 %v743, %v742
        %v818 = vpack.c.b16 %v745, %v744
        %v819 = vpack.c.b16 %v747, %v746
        %v820 = vpack.c.b16 %v749, %v748
        %v821 = vpack.c.b16 %v751, %v750
        %v822 = vpack.c.b16 %v753, %v752
        %v823 = vpack.c.b16 %v755, %v754
        %v824 = vpack.c.b16 %v757, %v756
        %v825 = vpack.c.b16 %v759, %v758
        %v826 = vpack.c.b16 %v761, %v760
        %v827 = vpack.c.b16 %v763, %v762
        %892 = vmatprep.subr.bf16.mxu0 0
        %893 = vmatpush1.bf16.msra.mxu0 %v764
        %894 = vmatprep.subr.bf16.mxu0 0
        %895 = vmatpush1.bf16.msra.mxu0 %v765
        %896 = vmatprep.subr.bf16.mxu0 0
        %897 = vmatpush1.bf16.msra.mxu0 %v766
        %898 = vmatprep.subr.bf16.mxu0 0
        %899 = vmatpush1.bf16.msra.mxu0 %v767
        %900 = vmatprep.subr.bf16.mxu0 0
        %901 = vmatpush1.bf16.msra.mxu0 %v768
        %902 = vmatprep.subr.bf16.mxu0 0
        %903 = vmatpush1.bf16.msra.mxu0 %v769
        %904 = vmatprep.subr.bf16.mxu0 0
        %905 = vmatpush1.bf16.msra.mxu0 %v770
        %906 = vmatprep.subr.bf16.mxu0 0
        %907 = vmatpush1.bf16.msra.mxu0 %v771
        %908 = vmatprep.subr.bf16.mxu0 0
        %909 = vmatpush1.bf16.msra.mxu0 %v772
        %910 = vmatprep.subr.bf16.mxu0 0
        %911 = vmatpush1.bf16.msra.mxu0 %v773
        %912 = vmatprep.subr.bf16.mxu0 0
        %913 = vmatpush1.bf16.msra.mxu0 %v774
        %914 = vmatprep.subr.bf16.mxu0 0
        %915 = vmatpush1.bf16.msra.mxu0 %v775
        %916 = vmatprep.subr.bf16.mxu0 0
        %917 = vmatpush1.bf16.msra.mxu0 %v776
        %918 = vmatprep.subr.bf16.mxu0 0
        %919 = vmatpush1.bf16.msra.mxu0 %v777
        %920 = vmatprep.subr.bf16.mxu0 0
        %921 = vmatpush1.bf16.msra.mxu0 %v778
        %922 = vmatprep.subr.bf16.mxu0 0
        %923 = vmatpush1.bf16.msra.mxu0 %v779
        %924 = vmatprep.mubr.bf16.mxu0 %v493
        %925 = vmatmul.mubr.bf16.gmra.mrb[0].mxu0 %v492
        %v926 = vpop.f32.mrb[0].mxu0
        %v927 = vadd.f32 %v478, %v926
        %v928 = vpop.f32.mrb[0].mxu0
        %v929 = vpop.f32.mrb[0].mxu0
        %v930 = vpop.f32.mrb[0].mxu0
        %931 = vdwg.mxu0
        %932 = vmatprep.subr.bf16.mxu0 0
        %933 = vmatpush1.bf16.msra.mxu0 %v780
        %934 = vmatprep.subr.bf16.mxu0 0
        %935 = vmatpush1.bf16.msra.mxu0 %v781
        %936 = vmatprep.subr.bf16.mxu0 0
        %937 = vmatpush1.bf16.msra.mxu0 %v782
        %938 = vmatprep.subr.bf16.mxu0 0
        %939 = vmatpush1.bf16.msra.mxu0 %v783
        %940 = vmatprep.subr.bf16.mxu0 0
        %941 = vmatpush1.bf16.msra.mxu0 %v784
        %942 = vmatprep.subr.bf16.mxu0 0
        %943 = vmatpush1.bf16.msra.mxu0 %v785
        %944 = vmatprep.subr.bf16.mxu0 0
        %945 = vmatpush1.bf16.msra.mxu0 %v786
        %946 = vmatprep.subr.bf16.mxu0 0
        %947 = vmatpush1.bf16.msra.mxu0 %v787
        %948 = vmatprep.subr.bf16.mxu0 0
        %949 = vmatpush1.bf16.msra.mxu0 %v788
        %950 = vmatprep.subr.bf16.mxu0 0
        %951 = vmatpush1.bf16.msra.mxu0 %v789
        %952 = vmatprep.subr.bf16.mxu0 0
        %953 = vmatpush1.bf16.msra.mxu0 %v790
        %954 = vmatprep.subr.bf16.mxu0 0
        %955 = vmatpush1.bf16.msra.mxu0 %v791
        %956 = vmatprep.subr.bf16.mxu0 0
        %957 = vmatpush1.bf16.msra.mxu0 %v792
        %958 = vmatprep.subr.bf16.mxu0 0
        %959 = vmatpush1.bf16.msra.mxu0 %v793
        %960 = vmatprep.subr.bf16.mxu0 0
        %961 = vmatpush1.bf16.msra.mxu0 %v794
        %962 = vmatprep.subr.bf16.mxu0 0
        %963 = vmatpush1.bf16.msra.mxu0 %v795
        %964 = vmatprep.mubr.bf16.mxu0 %v495
        %965 = vmatmul.mubr.bf16.gmra.mrb[0].mxu0 %v494
        %v966 = vpop.f32.mrb[0].mxu0
        %v967 = vadd.f32 %v927, %v966
        %v968 = vpop.f32.mrb[0].mxu0
        %v969 = vpop.f32.mrb[0].mxu0
        %v970 = vpop.f32.mrb[0].mxu0
        %971 = vdwg.mxu0
        %972 = vmatprep.subr.bf16.mxu0 0
        %973 = vmatpush1.bf16.msra.mxu0 %v796
        %974 = vmatprep.subr.bf16.mxu0 0
        %975 = vmatpush1.bf16.msra.mxu0 %v797
        %976 = vmatprep.subr.bf16.mxu0 0
        %977 = vmatpush1.bf16.msra.mxu0 %v798
        %978 = vmatprep.subr.bf16.mxu0 0
        %979 = vmatpush1.bf16.msra.mxu0 %v799
        %980 = vmatprep.subr.bf16.mxu0 0
        %981 = vmatpush1.bf16.msra.mxu0 %v800
        %982 = vmatprep.subr.bf16.mxu0 0
        %983 = vmatpush1.bf16.msra.mxu0 %v801
        %984 = vmatprep.subr.bf16.mxu0 0
        %985 = vmatpush1.bf16.msra.mxu0 %v802
        %986 = vmatprep.subr.bf16.mxu0 0
        %987 = vmatpush1.bf16.msra.mxu0 %v803
        %988 = vmatprep.subr.bf16.mxu0 0
        %989 = vmatpush1.bf16.msra.mxu0 %v804
        %990 = vmatprep.subr.bf16.mxu0 0
        %991 = vmatpush1.bf16.msra.mxu0 %v805
        %992 = vmatprep.subr.bf16.mxu0 0
        %993 = vmatpush1.bf16.msra.mxu0 %v806
        %994 = vmatprep.subr.bf16.mxu0 0
        %995 = vmatpush1.bf16.msra.mxu0 %v807
        %996 = vmatprep.subr.bf16.mxu0 0
        %997 = vmatpush1.bf16.msra.mxu0 %v808
        %998 = vmatprep.subr.bf16.mxu0 0
        %999 = vmatpush1.bf16.msra.mxu0 %v809
        %1000 = vmatprep.subr.bf16.mxu0 0
        %1001 = vmatpush1.bf16.msra.mxu0 %v810
        %1002 = vmatprep.subr.bf16.mxu0 0
        %1003 = vmatpush1.bf16.msra.mxu0 %v811
        %1004 = vmatprep.mubr.bf16.mxu0 %v497
        %1005 = vmatmul.mubr.bf16.gmra.mrb[0].mxu0 %v496
        %v1006 = vpop.f32.mrb[0].mxu0
        %v1007 = vadd.f32 %v967, %v1006
        %v1008 = vpop.f32.mrb[0].mxu0
        %v1009 = vpop.f32.mrb[0].mxu0
        %v1010 = vpop.f32.mrb[0].mxu0
        %1011 = vdwg.mxu0
        %1012 = vmatprep.subr.bf16.mxu0 0
        %1013 = vmatpush1.bf16.msra.mxu0 %v812
        %1014 = vmatprep.subr.bf16.mxu0 0
        %1015 = vmatpush1.bf16.msra.mxu0 %v813
        %1016 = vmatprep.subr.bf16.mxu0 0
        %1017 = vmatpush1.bf16.msra.mxu0 %v814
        %1018 = vmatprep.subr.bf16.mxu0 0
        %1019 = vmatpush1.bf16.msra.mxu0 %v815
        %1020 = vmatprep.subr.bf16.mxu0 0
        %1021 = vmatpush1.bf16.msra.mxu0 %v816
        %1022 = vmatprep.subr.bf16.mxu0 0
        %1023 = vmatpush1.bf16.msra.mxu0 %v817
        %1024 = vmatprep.subr.bf16.mxu0 0
        %1025 = vmatpush1.bf16.msra.mxu0 %v818
        %1026 = vmatprep.subr.bf16.mxu0 0
        %1027 = vmatpush1.bf16.msra.mxu0 %v819
        %1028 = vmatprep.subr.bf16.mxu0 0
        %1029 = vmatpush1.bf16.msra.mxu0 %v820
        %1030 = vmatprep.subr.bf16.mxu0 0
        %1031 = vmatpush1.bf16.msra.mxu0 %v821
        %1032 = vmatprep.subr.bf16.mxu0 0
        %1033 = vmatpush1.bf16.msra.mxu0 %v822
        %1034 = vmatprep.subr.bf16.mxu0 0
        %1035 = vmatpush1.bf16.msra.mxu0 %v823
        %1036 = vmatprep.subr.bf16.mxu0 0
        %1037 = vmatpush1.bf16.msra.mxu0 %v824
        %1038 = vmatprep.subr.bf16.mxu0 0
        %1039 = vmatpush1.bf16.msra.mxu0 %v825
        %1040 = vmatprep.subr.bf16.mxu0 0
        %1041 = vmatpush1.bf16.msra.mxu0 %v826
        %1042 = vmatprep.subr.bf16.mxu0 0
        %1043 = vmatpush1.bf16.msra.mxu0 %v827
        %1044 = vmatprep.mubr.bf16.mxu0 %v499
        %1045 = vmatmul.mubr.bf16.gmra.mrb[0].mxu0 %v498
        %v1046 = vpop.f32.mrb[0].mxu0
        %v1047 = vadd.f32 %v1007, %v1046
        %v1048 = vpop.f32.mrb[0].mxu0
        %v1049 = vpop.f32.mrb[0].mxu0
        %v1050 = vpop.f32.mrb[0].mxu0
        %1051 = vdwg.mxu0
        %v1052 = vmax.f32 %v1047, 0.0
        %v1053 = vpack.c.bf16 %v1052, %v1052
        %v1054 = vld [vmem:[#allocation9] sm:$0xff]
        %v1055 = vld [vmem:[#allocation9 + $0x8] sm:$0xff]
        %v1056 = vld [vmem:[#allocation9 + $0x10] sm:$0xff]
        %v1057 = vld [vmem:[#allocation9 + $0x18] sm:$0xff]
        %v1058 = vld [vmem:[#allocation9 + $0x20] sm:$0xff]
        %v1059 = vld [vmem:[#allocation9 + $0x28] sm:$0xff]
        %v1060 = vld [vmem:[#allocation9 + $0x30] sm:$0xff]
        %v1061 = vld [vmem:[#allocation9 + $0x38] sm:$0xff]
        %v1062 = vld [vmem:[#allocation9 + $0x40] sm:$0xff]
        %v1063 = vld [vmem:[#allocation9 + $0x48] sm:$0xff]
        %v1064 = vld [vmem:[#allocation9 + $0x50] sm:$0xff]
        %v1065 = vld [vmem:[#allocation9 + $0x58] sm:$0xff]
        %v1066 = vld [vmem:[#allocation9 + $0x60] sm:$0xff]
        %v1067 = vld [vmem:[#allocation9 + $0x68] sm:$0xff]
        %v1068 = vld [vmem:[#allocation9 + $0x70] sm:$0xff]
        %v1069 = vld [vmem:[#allocation9 + $0x78] sm:$0xff]
        %v1070 = vld [vmem:[%s5] sm:$0x3]
        %v1072 = vlaneseq
        %v1073 = vshrl.u32 %v1072, 7
        %v1074 = vsub.s32 0, %v1073
        %v1075 = vrot.slane %v1070, %v1074
        %v1076 = vlaneseq
        %v1077 = vshrl.u32 %v1076, 7
        %v1078 = vsub.s32 1, %v1077
        %v1079 = vrot.slane %v1070, %v1078
        %v1098 = vunpack.c.l.b16 %v1054
        %v1099 = vunpack.c.h.b16 %v1054
        %v1100 = vunpack.c.l.b16 %v1055
        %v1101 = vunpack.c.h.b16 %v1055
        %v1102 = vunpack.c.l.b16 %v1056
        %v1103 = vunpack.c.h.b16 %v1056
        %v1104 = vunpack.c.l.b16 %v1057
        %v1105 = vunpack.c.h.b16 %v1057
        %v1106 = vunpack.c.l.b16 %v1058
        %v1107 = vunpack.c.h.b16 %v1058
        %v1108 = vunpack.c.l.b16 %v1059
        %v1109 = vunpack.c.h.b16 %v1059
        %v1110 = vunpack.c.l.b16 %v1060
        %v1111 = vunpack.c.h.b16 %v1060
        %v1112 = vunpack.c.l.b16 %v1061
        %v1113 = vunpack.c.h.b16 %v1061
        %v1114 = vunpack.c.l.b16 %v1062
        %v1115 = vunpack.c.h.b16 %v1062
        %v1116 = vunpack.c.l.b16 %v1063
        %v1117 = vunpack.c.h.b16 %v1063
        %v1118 = vunpack.c.l.b16 %v1064
        %v1119 = vunpack.c.h.b16 %v1064
        %v1120 = vunpack.c.l.b16 %v1065
        %v1121 = vunpack.c.h.b16 %v1065
        %v1122 = vunpack.c.l.b16 %v1066
        %v1123 = vunpack.c.h.b16 %v1066
        %v1124 = vunpack.c.l.b16 %v1067
        %v1125 = vunpack.c.h.b16 %v1067
        %v1126 = vunpack.c.l.b16 %v1068
        %v1127 = vunpack.c.h.b16 %v1068
        %v1128 = vunpack.c.l.b16 %v1069
        %v1129 = vunpack.c.h.b16 %v1069
        %v1130 = vpack.c.b16 %v1100, %v1098
        %v1131 = vpack.c.b16 %v1101, %v1099
        %v1132 = vpack.c.b16 %v1104, %v1102
        %v1133 = vpack.c.b16 %v1105, %v1103
        %v1134 = vpack.c.b16 %v1108, %v1106
        %v1135 = vpack.c.b16 %v1109, %v1107
        %v1136 = vpack.c.b16 %v1112, %v1110
        %v1137 = vpack.c.b16 %v1113, %v1111
        %v1138 = vpack.c.b16 %v1116, %v1114
        %v1139 = vpack.c.b16 %v1117, %v1115
        %v1140 = vpack.c.b16 %v1120, %v1118
        %v1141 = vpack.c.b16 %v1121, %v1119
        %v1142 = vpack.c.b16 %v1124, %v1122
        %v1143 = vpack.c.b16 %v1125, %v1123
        %v1144 = vpack.c.b16 %v1128, %v1126
        %v1145 = vpack.c.b16 %v1129, %v1127
        %1162 = vmatprep.subr.bf16.mxu0 %v1131
        %1163 = vmatpush1.bf16.msra.mxu0 %v1130
        %1164 = vmatprep.subr.bf16.mxu0 %v1133
        %1165 = vmatpush1.bf16.msra.mxu0 %v1132
        %1166 = vmatprep.subr.bf16.mxu0 %v1135
        %1167 = vmatpush1.bf16.msra.mxu0 %v1134
        %1168 = vmatprep.subr.bf16.mxu0 %v1137
        %1169 = vmatpush1.bf16.msra.mxu0 %v1136
        %1170 = vmatprep.subr.bf16.mxu0 %v1139
        %1171 = vmatpush1.bf16.msra.mxu0 %v1138
        %1172 = vmatprep.subr.bf16.mxu0 %v1141
        %1173 = vmatpush1.bf16.msra.mxu0 %v1140
        %1174 = vmatprep.subr.bf16.mxu0 %v1143
        %1175 = vmatpush1.bf16.msra.mxu0 %v1142
        %1176 = vmatprep.subr.bf16.mxu0 %v1145
        %1177 = vmatpush1.bf16.msra.mxu0 %v1144
        %1178 = vmatprep.subr.bf16.mxu0 0
        %1179 = vmatpush1.bf16.msra.mxu0 0
        %1180 = vmatprep.subr.bf16.mxu0 0
        %1181 = vmatpush1.bf16.msra.mxu0 0
        %1182 = vmatprep.subr.bf16.mxu0 0
        %1183 = vmatpush1.bf16.msra.mxu0 0
        %1184 = vmatprep.subr.bf16.mxu0 0
        %1185 = vmatpush1.bf16.msra.mxu0 0
        %1186 = vmatprep.subr.bf16.mxu0 0
        %1187 = vmatpush1.bf16.msra.mxu0 0
        %1188 = vmatprep.subr.bf16.mxu0 0
        %1189 = vmatpush1.bf16.msra.mxu0 0
        %1190 = vmatprep.subr.bf16.mxu0 0
        %1191 = vmatpush1.bf16.msra.mxu0 0
        %1192 = vmatprep.subr.bf16.mxu0 0
        %1193 = vmatpush1.bf16.msra.mxu0 0
        %1194 = vmatprep.mubr.bf16.mxu0 0
        %1195 = vmatmul.mubr.bf16.gmra.mrb[0].mxu0 %v1053
        %v1196 = vpop.f32.mrb[0].mxu0
        %v1197 = vadd.f32 %v1075, %v1196
        %v1198 = vpop.f32.mrb[0].mxu0
        %v1199 = vadd.f32 %v1079, %v1198
        %v1200 = vpop.f32.mrb[0].mxu0
        %v1201 = vpop.f32.mrb[0].mxu0
        %1202 = vdwg.mxu0
        %1203 = vst [vmem:[%s333] sm:$0xff] %v1197
        %1204 = vst [vmem:[%s333 + $0x8] sm:$0xff] %v1199
        %v1205 = vlaneseq
        %v1206 = vand.u32 %v1205, 127
        %v1207 = vadd.s32 %v1206, 128
        %vm1208 = vcmp.lt.s32.totalorder %v1206, 168
        %vm1209 = vcmp.lt.s32.totalorder %v1207, 168
        %vm1210 = vcmp.ge.s32.totalorder %v1206, 168
        %vm1211 = vcmp.ge.s32.totalorder %v1207, 168
        %vm1212 = vcmp.lt.s32.totalorder %v1206, 179
        %vm1213 = vcmp.lt.s32.totalorder %v1207, 179
        %vm1214 = vmand %vm1210, %vm1212
        %vm1215 = vmand %vm1211, %vm1213
        %vm1216 = vcmp.ge.s32.totalorder %v1206, 179
        %vm1217 = vcmp.ge.s32.totalorder %v1207, 179
        %vm1218 = vcmp.lt.s32.totalorder %v1206, 186
        %vm1219 = vcmp.lt.s32.totalorder %v1207, 186
        %vm1220 = vmand %vm1216, %vm1218
        %vm1221 = vmand %vm1217, %vm1219
        %v1222 = vsel %vm1208, %v1197, -1e+30
        %v1223 = vsel %vm1209, %v1199, -1e+30
        %v1224 = vmax.f32 %v1222, %v1223
        %1225 = vmax.xlane.f32.xlu0 %v1224
        %v1226 = vpop.xlane.xlu0 %1225
        %v1227 = vsel %vm1214, %v1197, -1e+30
        %v1228 = vsel %vm1215, %v1199, -1e+30
        %v1229 = vmax.f32 %v1227, %v1228
        %1230 = vmax.xlane.f32.xlu0 %v1229
        %v1231 = vpop.xlane.xlu0 %1230
        %v1232 = vsel %vm1220, %v1197, -1e+30
        %v1233 = vsel %vm1221, %v1199, -1e+30
        %v1234 = vmax.f32 %v1232, %v1233
        %1235 = vmax.xlane.f32.xlu0 %v1234
        %v1236 = vpop.xlane.xlu0 %1235
        %v1237 = vsel %vm1214, %v1231, %v1236
        %v1238 = vsel %vm1215, %v1231, %v1236
        %v1239 = vsel %vm1208, %v1226, %v1237
        %v1240 = vsel %vm1209, %v1226, %v1238
        %v1241 = vsub.f32 %v1197, %v1239
        %v1242 = vsub.f32 %v1199, %v1240
        %v1243 = vmul.f32 %v1241, 1.442695
        %v1244 = vpow.pop %v1243
        %v1245 = vmul.f32 %v1242, 1.442695
        %v1246 = vpow.pop %v1245
        %v1247 = vsel %vm1208, %v1244, 0.0
        %v1248 = vsel %vm1209, %v1246, 0.0
        %v1249 = vadd.f32 %v1247, %v1248
        %1250 = vadd.xlane.f32.xlu0 %v1249
        %v1251 = vpop.xlane.xlu0 %1250
        %v1252 = vsel %vm1214, %v1244, 0.0
        %v1253 = vsel %vm1215, %v1246, 0.0
        %v1254 = vadd.f32 %v1252, %v1253
        %1255 = vadd.xlane.f32.xlu0 %v1254
        %v1256 = vpop.xlane.xlu0 %1255
        %v1257 = vsel %vm1220, %v1244, 0.0
        %v1258 = vsel %vm1221, %v1246, 0.0
        %v1259 = vadd.f32 %v1257, %v1258
        %1260 = vadd.xlane.f32.xlu0 %v1259
        %v1261 = vpop.xlane.xlu0 %1260
        %v1262 = vlog2.pop %v1251
        %v1263 = vmul.f32 %v1262, 0.6931472
        %v1264 = vadd.f32 %v1226, %v1263
        %v1265 = vlog2.pop %v1256
        %v1266 = vmul.f32 %v1265, 0.6931472
        %v1267 = vadd.f32 %v1231, %v1266
        %v1268 = vlog2.pop %v1261
        %v1269 = vmul.f32 %v1268, 0.6931472
        %v1270 = vadd.f32 %v1236, %v1269
        %vm1271 = vcmask 7168
        %v1272 = vsel %vm1271, %v1264, 0.0
        %1273 = vadd.xlane.f32.xlu0 %v1272
        %v1274 = vpop.xlane.xlu0 %1273
        %v1275 = vrot.slane %v1274, 4
        %v1276 = vadd.f32 %v1274, %v1275
        %v1277 = vrot.slane %v1276, 2
        %v1278 = vadd.f32 %v1276, %v1277
        %v1279 = vrot.slane %v1278, 1
        %v1280 = vadd.f32 %v1278, %v1279
        %s1281 = vtos %v1280
        %v1282 = vsel %vm1271, %v1267, 0.0
        %1283 = vadd.xlane.f32.xlu0 %v1282
        %v1284 = vpop.xlane.xlu0 %1283
        %v1285 = vrot.slane %v1284, 4
        %v1286 = vadd.f32 %v1284, %v1285
        %v1287 = vrot.slane %v1286, 2
        %v1288 = vadd.f32 %v1286, %v1287
        %v1289 = vrot.slane %v1288, 1
        %v1290 = vadd.f32 %v1288, %v1289
        %s1291 = vtos %v1290
        %v1292 = vsel %vm1271, %v1270, 0.0
        %1293 = vadd.xlane.f32.xlu0 %v1292
        %v1294 = vpop.xlane.xlu0 %1293
        %v1295 = vrot.slane %v1294, 4
        %v1296 = vadd.f32 %v1294, %v1295
        %v1297 = vrot.slane %v1296, 2
        %v1298 = vadd.f32 %v1296, %v1297
        %v1299 = vrot.slane %v1298, 1
        %v1300 = vadd.f32 %v1298, %v1299
        %s1301 = vtos %v1300
        %v1302 = vld [vmem:[%s339] sm:$0xff]
        %1303 = vset.pattern.permute.xlu0 0
        %1304 = vperm.xlu0 %1303, %v1302
        %v1305 = vpop.permute.xlu0 %1304
        %vm1306 = vcmp.eq.s32.totalorder %v1206, %v1305
        %vm1307 = vcmp.eq.s32.totalorder %v1207, %v1305
        %v1308 = vsel %vm1306, %v1197, 0.0
        %v1309 = vsel %vm1307, %v1199, 0.0
        %v1310 = vadd.f32 %v1308, %v1309
        %1311 = vadd.xlane.f32.xlu0 %v1310
        %v1312 = vpop.xlane.xlu0 %1311
        %v1313 = vrot.slane %v1312, 4
        %v1314 = vadd.f32 %v1312, %v1313
        %v1315 = vrot.slane %v1314, 2
        %v1316 = vadd.f32 %v1314, %v1315
        %v1317 = vrot.slane %v1316, 1
        %v1318 = vadd.f32 %v1316, %v1317
        %s1319 = vtos %v1318
        %1320 = vset.pattern.permute.xlu0 1
        %1321 = vperm.xlu0 %1320, %v1302
        %v1322 = vpop.permute.xlu0 %1321
        %vm1323 = vcmp.eq.s32.totalorder %v1206, %v1322
        %vm1324 = vcmp.eq.s32.totalorder %v1207, %v1322
        %v1325 = vsel %vm1323, %v1197, 0.0
        %v1326 = vsel %vm1324, %v1199, 0.0
        %v1327 = vadd.f32 %v1325, %v1326
        %1328 = vadd.xlane.f32.xlu0 %v1327
        %v1329 = vpop.xlane.xlu0 %1328
        %v1330 = vrot.slane %v1329, 4
        %v1331 = vadd.f32 %v1329, %v1330
        %v1332 = vrot.slane %v1331, 2
        %v1333 = vadd.f32 %v1331, %v1332
        %v1334 = vrot.slane %v1333, 1
        %v1335 = vadd.f32 %v1333, %v1334
        %s1336 = vtos %v1335
        %1337 = vset.pattern.permute.xlu0 2
        %1338 = vperm.xlu0 %1337, %v1302
        %v1339 = vpop.permute.xlu0 %1338
        %vm1340 = vcmp.eq.s32.totalorder %v1206, %v1339
        %vm1341 = vcmp.eq.s32.totalorder %v1207, %v1339
        %v1342 = vsel %vm1340, %v1197, 0.0
        %v1343 = vsel %vm1341, %v1199, 0.0
        %v1344 = vadd.f32 %v1342, %v1343
        %1345 = vadd.xlane.f32.xlu0 %v1344
        %v1346 = vpop.xlane.xlu0 %1345
        %v1347 = vrot.slane %v1346, 4
        %v1348 = vadd.f32 %v1346, %v1347
        %v1349 = vrot.slane %v1348, 2
        %v1350 = vadd.f32 %v1348, %v1349
        %v1351 = vrot.slane %v1350, 1
        %v1352 = vadd.f32 %v1350, %v1351
        %s1353 = vtos %v1352
        %p1354 = scmp.eq.s32.totalorder %s27, 0
        // Predicated region
        $region57: #{_run_kernel.1} parent=43 // pred_check
          %p1355 = pneg %p1354
        $region58: #{_run_kernel.1} parent=43 // pred_check_branch
          %1357 = sbr.rel (%p1355) target = $region60
        $region59: #{_run_kernel.1} parent=43 // pred_region
          %s1358 = scalar_lea.smem [#allocation2], 0
          %1359 = sst [smem:[%s1358]] 0.0
          %s1360 = scalar_lea.smem [#allocation2], 1
          %1361 = sst [smem:[%s1360]] 0.0
          %s1362 = scalar_lea.smem [#allocation2], 2
          %1363 = sst [smem:[%s1362]] 0.0
        $region60: #{_run_kernel.1} parent=43 // pred_fallthru
          _
        %s1364 = sld [smem:[#allocation2]]
        %s1365 = ssub.f32 %s1281, %s1319
        %s1366 = smul.f32 %s1365, 0.0625
        %s1367 = sadd.f32 %s1364, %s1366
        %s1368 = scalar_lea.smem [#allocation2], 0
        %1369 = sst [smem:[%s1368]] %s1367
        %s1370 = sld [smem:[#allocation2 + $0x1]]
        %s1371 = ssub.f32 %s1291, %s1336
        %s1372 = smul.f32 %s1371, 0.0625
        %s1373 = sadd.f32 %s1370, %s1372
        %s1374 = scalar_lea.smem [#allocation2], 1
        %1375 = sst [smem:[%s1374]] %s1373
        %s1376 = sld [smem:[#allocation2 + $0x2]]
        %s1377 = ssub.f32 %s1301, %s1353
        %s1378 = smul.f32 %s1377, 0.0625
        %s1379 = sadd.f32 %s1376, %s1378
        %s1380 = scalar_lea.smem [#allocation2], 2
        %1381 = sst [smem:[%s1380]] %s1379
        %p1382 = scmp.eq.s32.totalorder %s27, 1
        // Predicated region
        $region61: #{_run_kernel.1} parent=43 // pred_check
          %p1383 = pneg %p1382
        $region62: #{_run_kernel.1} parent=43 // pred_check_branch
          %1385 = sbr.rel (%p1383) target = $region64
        $region63: #{_run_kernel.1} parent=43 // pred_region
          %s1386 = sld [smem:[#allocation2]]
          %s1387 = sld [smem:[#allocation2 + $0x1]]
          %s1388 = sld [smem:[#allocation2 + $0x2]]
          %s1389 = scalar_lea.smem [#allocation11], 0
          %1390 = sst [smem:[%s1389]] %s1386
          %s1391 = scalar_lea.smem [#allocation11], 1
          %1392 = sst [smem:[%s1391]] %s1387
          %s1393 = scalar_lea.smem [#allocation11], 2
          %1394 = sst [smem:[%s1393]] %s1388
          %s1395 = sadd.f32 %s1386, %s1387
          %s1396 = sadd.f32 %s1395, %s1388
          %s1397 = scalar_lea.smem [#allocation11], 3
          %1398 = sst [smem:[%s1397]] %s1396
        $region64: #{_run_kernel.1} parent=43 // pred_fallthru
          _
        %s1399 = sand.u32 %s171, 1
        %s1400 = scalar_lea.sflag [#allocation5], %s1399
        %s1401 = sand.u32 %s171, 1
        %s1402 = smul.addr %s1401, 16
        %s1403 = scalar_lea.vmem [#allocation10], %s1402
        // Predicated region
        $region65: #{_run_kernel.1} parent=43 // pred_check
          %p1404 = pneg %p181
        $region66: #{_run_kernel.1} parent=43 // pred_check_branch
          %1406 = sbr.rel (%p1404) target = $region68
        $region67: #{_run_kernel.1} parent=43 // pred_region
          %s1408 = ssub.s32 256, 256
          %1409 = vsyncadd %s1400, %s1408
          %s1410 = smul.addr %s27, 2
          %s1411 = smul.addr %s1410, 128
          %s1412 = scalar_lea.hbm %s6, %s1411
          %s1414 = sshll.u32 %s1403, 4
          %s1415 = int_to_ptr.vmem [resolvable:$true] %s1414
          %1417 = dma.vmem_to_hbm [thread:$0]  %s1415, 256, %s1412, %s1400
        $region68: #{_run_kernel.1} parent=43 // pred_fallthru
          _
        // Predicated region
        $region69: #{_run_kernel.1} parent=43 // pred_check
          %p1418 = pneg %p202
        $region70: #{_run_kernel.1} parent=43 // pred_check_branch
          %1420 = sbr.rel (%p1418) target = $region72
        $region71: #{_run_kernel.1} parent=43 // pred_region
          %s1422 = ssub.s32 16, 16
          %1423 = vsyncadd [#allocation6], %s1422
          %1426 = dma.smem_to_hbm [#allocation11], 16, %s7, [#allocation6]
        $region72: #{_run_kernel.1} parent=43 // pred_fallthru
          _
        // Predicated region
        $region73: #{_run_kernel.1} parent=43 // pred_check
          %p1427 = pneg %p202
        $region74: #{_run_kernel.1} parent=43 // pred_check_branch
          %1429 = sbr.rel (%p1427) target = $region76
        $region75: #{_run_kernel.1} parent=43 // pred_region
          %1430 = dma.done [#allocation6], 16
        $region76: #{_run_kernel.1} parent=43 // pred_fallthru
          _
        %1431 = sfence
      $region44: #{_run_kernel.1} parent=5 // pred_fallthru
        _
      %p1432 = scmp.le.s32.totalorder 2, %s22
      // Predicated region
      $region77: #{_run_kernel.1} parent=5 // pred_check
        %p1433 = pneg %p1432
      $region78: #{_run_kernel.1} parent=5 // pred_check_branch
        %1435 = sbr.rel (%p1433) target = $region80
      $region79: #{_run_kernel.1} parent=5 // pred_region
        %s1436 = ssub.s32 %s22, 2
        // Predicated region
        $region81: #{_run_kernel.1} parent=79 // pred_check
          %p1437 = pneg %p187
        $region82: #{_run_kernel.1} parent=79 // pred_check_branch
          %1439 = sbr.rel (%p1437) target = $region84
        $region83: #{_run_kernel.1} parent=79 // pred_region
          %s1440 = sand.u32 %s172, 1
          %s1441 = scalar_lea.sflag [#allocation5], %s1440
          %s1442 = sand.u32 %s172, 1
          %s1443 = smul.addr %s1442, 16
          %s1444 = scalar_lea.vmem [#allocation10], %s1443
          %1445 = dma.done %s1441, 256
        $region84: #{_run_kernel.1} parent=79 // pred_fallthru
          _
      $region80: #{_run_kernel.1} parent=5 // pred_fallthru
        _
    $region6: #{_run_kernel.1} parent=1 // loop_footer
      %s26 = sadd.s32 1, %s22
    $region7: #{_run_kernel.1} parent=1 // loop_footer_branch
      %21 = sbr.rel target = $region3
    $region8: #{_run_kernel.1} parent=1 // loop_exit
      _
    %1446 = vsyncpa [#allocation4], 1
    %s1447 = scalar_lea.sflag [#allocation4], 1
    %1448 = vsyncpa %s1447, 1
    %1449 = vsyncpa [#allocation8], 1
    %1450 = vsyncpa [#allocation5], 1
    %s1451 = scalar_lea.sflag [#allocation5], 1
    %1452 = vsyncpa %s1451, 1
    %1453 = vsyncpa [#allocation6], 1
    %s1454 = scalar_lea.sflag [#allocation6], 1
    %1455 = vsyncpa %s1454, 1

</llo_original>
